<compile_context>
chip_gen: v6e
topology: v6e:2x2x1
jax: 0.10.0
libtpu: 0.0.40
codegen_flags: <defaults>
</compile_context>

<pallas_src>
import jax
import jax.numpy as jnp
from jax.experimental import pallas as pl
from jax.experimental.pallas import tpu as pltpu

INPUT_DIM = 20
HIDDEN_DIM = 100
OUTPUT_DIM = 10
NUM_HIDDEN_LAYERS = 10  # 1 input Linear + 9 hidden Linears + 1 output Linear

INPUT_PAD = 32     # K dim of first matmul -> bf16 sublane-tile (16) multiple
HIDDEN_PAD = 128   # lane-dense hidden width
OUTPUT_PAD = 128   # lane-dense output width (sliced to 10 after the call)
BATCH_TILE = 2048  # max rows per grid step (VMEM is nowhere near a limit)
TILE_ALIGN = 32    # tb multiple of 32 -> each half-tile stays bf16-sublane aligned


def _round_up(x, m):
    return ((x + m - 1) // m) * m


def _bf16_eup_ok():
    """bf16 tanh only where the EUP/VPU have a bf16 path (v6e / v7x)."""
    try:
        kind = jax.devices()[0].device_kind.lower()
        return ("v6" in kind) or ("v7" in kind)
    except Exception:
        return False


_BF16_ACT = _bf16_eup_ok()


def _make_mlp_kernel(bf16_act: bool):
    act_dt = jnp.bfloat16 if bf16_act else jnp.float32

    def kernel(x_ref, w_in_ref, b_in_ref, w_h_ref, b_h_ref, w_out_ref,
               b_out_ref, o_ref):
        tb = x_ref.shape[0]
        half = tb // 2  # tb is a multiple of 32 -> half is bf16-sublane aligned

        w_in = w_in_ref[...]
        b_in = b_in_ref[...]
        w_out = w_out_ref[...]
        b_out = b_out_ref[...]

        # Two independent sub-tiles, both layer chains unrolled in the same
        # basic block so the LLO scheduler can co-issue one half's tanh (EUP)
        # with the other half's matmul (MXU).  x arrives pre-cast to bf16.
        hs = []
        for p in range(2):
            xp = x_ref[p * half:(p + 1) * half, :]
            z = jnp.dot(xp, w_in, preferred_element_type=jnp.float32) + b_in
            hs.append(jnp.maximum(z.astype(act_dt), 0).astype(jnp.bfloat16))

        # Hidden layers: Linear(128pad -> 128pad) + Tanh, statically unrolled,
        # interleaved across the two sub-tiles.
        for i in range(NUM_HIDDEN_LAYERS - 1):
            w = w_h_ref[i]
            b = b_h_ref[i]
            for p in range(2):
                z = jnp.dot(hs[p], w, preferred_element_type=jnp.float32) + b
                # bf16 tanh on v6e/v7x (this layer is EUP-bound); f32 on v5e.
                hs[p] = jnp.tanh(z.astype(act_dt)).astype(jnp.bfloat16)

        # Output layer: Linear(128pad -> 128pad); store bf16 *logits*.
        # Sigmoid is applied in the wrapper on the 10 real columns only.
        for p in range(2):
            logits = jnp.dot(hs[p], w_out,
                             preferred_element_type=jnp.float32) + b_out
            o_ref[p * half:(p + 1) * half, :] = logits.astype(o_ref.dtype)

    return kernel


def prepare_params(w_in, b_in, w_h, b_h, w_out, b_out):
    """Zero-pad feature dims (20->32, 100->128, 10->128) and pre-cast weights
    to bf16 once."""
    H, HP, OP, IP = HIDDEN_DIM, HIDDEN_PAD, OUTPUT_PAD, INPUT_PAD
    nh = NUM_HIDDEN_LAYERS - 1
    w_in_p = jnp.zeros((IP, HP), jnp.bfloat16)
    w_in_p = w_in_p.at[:INPUT_DIM, :H].set(w_in.astype(jnp.bfloat16))
    b_in_p = jnp.zeros((1, HP), jnp.float32).at[:, :H].set(
        b_in.reshape(1, H).astype(jnp.float32))
    w_h_p = jnp.zeros((nh, HP, HP), jnp.bfloat16)
    w_h_p = w_h_p.at[:, :H, :H].set(w_h.astype(jnp.bfloat16))
    b_h_p = jnp.zeros((nh, 1, HP), jnp.float32).at[:, :, :H].set(
        b_h.reshape(nh, 1, H).astype(jnp.float32))
    w_out_p = jnp.zeros((HP, OP), jnp.bfloat16)
    w_out_p = w_out_p.at[:H, :OUTPUT_DIM].set(w_out.astype(jnp.bfloat16))
    b_out_p = jnp.zeros((1, OP), jnp.float32).at[:, :OUTPUT_DIM].set(
        b_out.reshape(1, OUTPUT_DIM).astype(jnp.float32))
    return w_in_p, b_in_p, w_h_p, b_h_p, w_out_p, b_out_p


@jax.jit
def deep_binary_net(x, w_in_p, b_in_p, w_h_p, b_h_p, w_out_p, b_out_p):
    """x: (B, INPUT_DIM) f32; params from prepare_params (padded + bf16)."""
    batch = x.shape[0]
    nh = NUM_HIDDEN_LAYERS - 1

    # Adaptive batch tiling:
    #  * even number of grid steps (>= 2) so v7x's "parallel" batch axis uses
    #    both TensorCores (sequential-loop no-op on 1-TC chips),
    #  * tb rounded only to TILE_ALIGN so batch-padding waste stays small
    #    instead of padding all the way to a BATCH_TILE multiple.
    n_steps = max(2, pl.cdiv(batch, BATCH_TILE))
    if n_steps % 2:
        n_steps += 1
    tb = _round_up(pl.cdiv(batch, n_steps), TILE_ALIGN)
    pb = tb * n_steps

    # Pad features 20 -> 32 and batch -> pb; cast x to bf16 once here
    # (halves the x DMA and removes the in-kernel cast).
    x_pad = jnp.zeros((pb, INPUT_PAD), jnp.bfloat16)
    x_pad = x_pad.at[:batch, :INPUT_DIM].set(x.astype(jnp.bfloat16))

    # Advisory cost estimate (per padded batch, real feature dims).
    flops = 2 * pb * (INPUT_DIM * HIDDEN_DIM
                      + nh * HIDDEN_DIM * HIDDEN_DIM
                      + HIDDEN_DIM * OUTPUT_DIM)
    transc = pb * nh * HIDDEN_DIM
    weight_bytes = (w_in_p.size + w_h_p.size + w_out_p.size) * 2 \
        + (b_in_p.size + b_h_p.size + b_out_p.size) * 4
    bytes_acc = pb * (INPUT_PAD + OUTPUT_PAD) * 2 + weight_bytes

    kernel = _make_mlp_kernel(_BF16_ACT)

    out_padded = pl.pallas_call(
        kernel,
        out_shape=jax.ShapeDtypeStruct((pb, OUTPUT_PAD), jnp.bfloat16),
        grid=(n_steps,),
        in_specs=[
            pl.BlockSpec((tb, INPUT_PAD), lambda i: (i, 0)),
            # Weights/biases: constant index_map -> stay resident in VMEM.
            pl.BlockSpec((INPUT_PAD, HIDDEN_PAD), lambda i: (0, 0)),
            pl.BlockSpec((1, HIDDEN_PAD), lambda i: (0, 0)),
            pl.BlockSpec((nh, HIDDEN_PAD, HIDDEN_PAD), lambda i: (0, 0, 0)),
            pl.BlockSpec((nh, 1, HIDDEN_PAD), lambda i: (0, 0, 0)),
            pl.BlockSpec((HIDDEN_PAD, OUTPUT_PAD), lambda i: (0, 0)),
            pl.BlockSpec((1, OUTPUT_PAD), lambda i: (0, 0)),
        ],
        out_specs=pl.BlockSpec((tb, OUTPUT_PAD), lambda i: (i, 0)),
        compiler_params=pltpu.CompilerParams(
            dimension_semantics=("parallel",)),
        cost_estimate=pl.CostEstimate(
            flops=int(flops), transcendentals=int(transc),
            bytes_accessed=int(bytes_acc)),
    )(x_pad, w_in_p, b_in_p, w_h_p, b_h_p, w_out_p, b_out_p)

    # Slice to real rows / columns, then sigmoid in f32 (only 10 real lanes).
    logits = out_padded[:batch, :OUTPUT_DIM].astype(jnp.float32)
    return jax.nn.sigmoid(logits)


def init_params(key):
    """Deterministic init mimicking PyTorch's U(-1/sqrt(fan_in), 1/sqrt(fan_in))."""
    keys = jax.random.split(key, 6)

    def uniform(k, shape, fan_in):
        bound = 1.0 / jnp.sqrt(jnp.asarray(fan_in, jnp.float32))
        return jax.random.uniform(k, shape, jnp.float32, -bound, bound)

    # Stored directly as (in, out) (i.e. already W.T relative to PyTorch).
    w_in = uniform(keys[0], (INPUT_DIM, HIDDEN_DIM), INPUT_DIM)
    b_in = uniform(keys[1], (1, HIDDEN_DIM), INPUT_DIM)
    w_h = uniform(keys[2], (NUM_HIDDEN_LAYERS - 1, HIDDEN_DIM, HIDDEN_DIM),
                  HIDDEN_DIM)
    b_h = uniform(keys[3], (NUM_HIDDEN_LAYERS - 1, HIDDEN_DIM), HIDDEN_DIM)
    w_out = uniform(keys[4], (HIDDEN_DIM, OUTPUT_DIM), HIDDEN_DIM)
    b_out = uniform(keys[5], (1, OUTPUT_DIM), HIDDEN_DIM)
    return w_in, b_in, w_h, b_h, w_out, b_out


def reference_forward(x, w_in, b_in, w_h, b_h, w_out, b_out):
    h = jnp.maximum(x @ w_in + b_in, 0.0)
    for i in range(NUM_HIDDEN_LAYERS - 1):
        h = jnp.tanh(h @ w_h[i] + b_h[i])
    return jax.nn.sigmoid(h @ w_out + b_out)


if __name__ == "__main__":
    key = jax.random.PRNGKey(0)
    kx, kp = jax.random.split(key)

    batch = 2
    x = jax.random.normal(kx, (batch, INPUT_DIM), jnp.float32)
    params = init_params(kp)
    padded_params = prepare_params(*params)

    out = deep_binary_net(x, *padded_params)
    out = jax.block_until_ready(out)

    ref = reference_forward(x, *params)  # pure-f32 reference
    assert out.shape == (batch, OUTPUT_DIM)
    # bf16 matmul operands (+ bf16 tanh chain on v6e/v7x) with f32
    # accumulation -> looser tolerance vs the f32 reference.
    assert jnp.allclose(out, ref, atol=3e-2, rtol=0.0), "mismatch vs reference"

    # TODO(synk): the PyTorch module's trace_flag per-layer printing is
    # side-effect-only debug output; numerics equal self.model(x), which is
    # exactly what the kernel reproduces.
    print("KERNEL_OK")
</pallas_src>

<mosaic_0001>
module attributes {stable_mosaic.version = 11 : i64} {
  func.func @kernel(%arg0: i32, %arg1: memref<32x32xbf16, #tpu.memory_space<vmem>>, %arg2: memref<32x128xbf16, #tpu.memory_space<vmem>>, %arg3: memref<1x128xf32, #tpu.memory_space<vmem>>, %arg4: memref<9x128x128xbf16, #tpu.memory_space<vmem>>, %arg5: memref<9x1x128xf32, #tpu.memory_space<vmem>>, %arg6: memref<128x128xbf16, #tpu.memory_space<vmem>>, %arg7: memref<1x128xf32, #tpu.memory_space<vmem>>, %arg8: memref<32x128xbf16, #tpu.memory_space<vmem>>) attributes {dimension_semantics = [#tpu.dimension_semantics<parallel>], iteration_bounds = array<i64: 2>, scalar_prefetch = 0 : i64, scratch_operands = 0 : i64, tpu.core_type = #tpu.core_type<tc>, window_params = [{transform_indices = @transform_0, window_bounds = array<i64: 32, 32>}, {pipeline_mode = #tpu.pipeline_mode<synchronous>, transform_indices = @transform_1, window_bounds = array<i64: 32, 128>}, {pipeline_mode = #tpu.pipeline_mode<synchronous>, transform_indices = @transform_2, window_bounds = array<i64: 1, 128>}, {pipeline_mode = #tpu.pipeline_mode<synchronous>, transform_indices = @transform_3, window_bounds = array<i64: 9, 128, 128>}, {pipeline_mode = #tpu.pipeline_mode<synchronous>, transform_indices = @transform_4, window_bounds = array<i64: 9, 1, 128>}, {pipeline_mode = #tpu.pipeline_mode<synchronous>, transform_indices = @transform_5, window_bounds = array<i64: 128, 128>}, {pipeline_mode = #tpu.pipeline_mode<synchronous>, transform_indices = @transform_6, window_bounds = array<i64: 1, 128>}, {transform_indices = @transform_7, window_bounds = array<i64: 32, 128>}]} {
    %c0 = arith.constant 0 : index
    %c0_0 = arith.constant 0 : index
    %0 = vector.load %arg2[%c0, %c0_0] : memref<32x128xbf16, #tpu.memory_space<vmem>>, vector<32x128xbf16>
    %c0_1 = arith.constant 0 : index
    %c0_2 = arith.constant 0 : index
    %1 = vector.load %arg3[%c0_1, %c0_2] : memref<1x128xf32, #tpu.memory_space<vmem>>, vector<1x128xf32>
    %c0_3 = arith.constant 0 : index
    %c0_4 = arith.constant 0 : index
    %2 = vector.load %arg6[%c0_3, %c0_4] : memref<128x128xbf16, #tpu.memory_space<vmem>>, vector<128x128xbf16>
    %c0_5 = arith.constant 0 : index
    %c0_6 = arith.constant 0 : index
    %3 = vector.load %arg7[%c0_5, %c0_6] : memref<1x128xf32, #tpu.memory_space<vmem>>, vector<1x128xf32>
    %c0_7 = arith.constant 0 : index
    %c0_8 = arith.constant 0 : index
    %4 = vector.load %arg1[%c0_7, %c0_8] : memref<32x32xbf16, #tpu.memory_space<vmem>>, vector<16x32xbf16>
    %cst = arith.constant dense<0.000000e+00> : vector<16x128xf32>
    %5 = tpu.matmul %4, %0, %cst {dimension_numbers = #tpu.dot_dimension_numbers<[1], [0], [0], [1], [0, 0, 1, 1], [], []>} : vector<16x32xbf16>, vector<32x128xbf16>, vector<16x128xf32> -> vector<16x128xf32>
    %6 = vector.broadcast %1 : vector<1x128xf32> to vector<16x128xf32>
    %7 = arith.addf %5, %6 : vector<16x128xf32>
    %cst_9 = arith.constant 0.000000e+00 : f32
    %8 = vector.broadcast %cst_9 : f32 to vector<16x128xf32>
    %9 = arith.maximumf %7, %8 : vector<16x128xf32>
    %10 = arith.truncf %9 : vector<16x128xf32> to vector<16x128xbf16>
    %c16 = arith.constant 16 : index
    %c0_10 = arith.constant 0 : index
    %11 = vector.load %arg1[%c16, %c0_10] : memref<32x32xbf16, #tpu.memory_space<vmem>>, vector<16x32xbf16>
    %cst_11 = arith.constant dense<0.000000e+00> : vector<16x128xf32>
    %12 = tpu.matmul %11, %0, %cst_11 {dimension_numbers = #tpu.dot_dimension_numbers<[1], [0], [0], [1], [0, 0, 1, 1], [], []>} : vector<16x32xbf16>, vector<32x128xbf16>, vector<16x128xf32> -> vector<16x128xf32>
    %13 = vector.broadcast %1 : vector<1x128xf32> to vector<16x128xf32>
    %14 = arith.addf %12, %13 : vector<16x128xf32>
    %cst_12 = arith.constant 0.000000e+00 : f32
    %15 = vector.broadcast %cst_12 : f32 to vector<16x128xf32>
    %16 = arith.maximumf %14, %15 : vector<16x128xf32>
    %17 = arith.truncf %16 : vector<16x128xf32> to vector<16x128xbf16>
    %c0_13 = arith.constant 0 : index
    %c0_14 = arith.constant 0 : index
    %c0_15 = arith.constant 0 : index
    %18 = vector.load %arg4[%c0_13, %c0_14, %c0_15] : memref<9x128x128xbf16, #tpu.memory_space<vmem>>, vector<1x128x128xbf16>
    %19 = vector.shape_cast %18 : vector<1x128x128xbf16> to vector<128x128xbf16>
    %c0_16 = arith.constant 0 : index
    %c0_17 = arith.constant 0 : index
    %c0_18 = arith.constant 0 : index
    %20 = vector.load %arg5[%c0_16, %c0_17, %c0_18] : memref<9x1x128xf32, #tpu.memory_space<vmem>>, vector<1x1x128xf32>
    %21 = vector.shape_cast %20 : vector<1x1x128xf32> to vector<1x128xf32>
    %cst_19 = arith.constant dense<0.000000e+00> : vector<16x128xf32>
    %22 = tpu.matmul %10, %19, %cst_19 {dimension_numbers = #tpu.dot_dimension_numbers<[1], [0], [0], [1], [0, 0, 1, 1], [], []>} : vector<16x128xbf16>, vector<128x128xbf16>, vector<16x128xf32> -> vector<16x128xf32>
    %23 = vector.broadcast %21 : vector<1x128xf32> to vector<16x128xf32>
    %24 = arith.addf %22, %23 : vector<16x128xf32>
    %25 = math.tanh %24 : vector<16x128xf32>
    %26 = arith.truncf %25 : vector<16x128xf32> to vector<16x128xbf16>
    %cst_20 = arith.constant dense<0.000000e+00> : vector<16x128xf32>
    %27 = tpu.matmul %17, %19, %cst_20 {dimension_numbers = #tpu.dot_dimension_numbers<[1], [0], [0], [1], [0, 0, 1, 1], [], []>} : vector<16x128xbf16>, vector<128x128xbf16>, vector<16x128xf32> -> vector<16x128xf32>
    %28 = vector.broadcast %21 : vector<1x128xf32> to vector<16x128xf32>
    %29 = arith.addf %27, %28 : vector<16x128xf32>
    %30 = math.tanh %29 : vector<16x128xf32>
    %31 = arith.truncf %30 : vector<16x128xf32> to vector<16x128xbf16>
    %c1 = arith.constant 1 : index
    %c0_21 = arith.constant 0 : index
    %c0_22 = arith.constant 0 : index
    %32 = vector.load %arg4[%c1, %c0_21, %c0_22] : memref<9x128x128xbf16, #tpu.memory_space<vmem>>, vector<1x128x128xbf16>
    %33 = vector.shape_cast %32 : vector<1x128x128xbf16> to vector<128x128xbf16>
    %c1_23 = arith.constant 1 : index
    %c0_24 = arith.constant 0 : index
    %c0_25 = arith.constant 0 : index
    %34 = vector.load %arg5[%c1_23, %c0_24, %c0_25] : memref<9x1x128xf32, #tpu.memory_space<vmem>>, vector<1x1x128xf32>
    %35 = vector.shape_cast %34 : vector<1x1x128xf32> to vector<1x128xf32>
    %cst_26 = arith.constant dense<0.000000e+00> : vector<16x128xf32>
    %36 = tpu.matmul %26, %33, %cst_26 {dimension_numbers = #tpu.dot_dimension_numbers<[1], [0], [0], [1], [0, 0, 1, 1], [], []>} : vector<16x128xbf16>, vector<128x128xbf16>, vector<16x128xf32> -> vector<16x128xf32>
    %37 = vector.broadcast %35 : vector<1x128xf32> to vector<16x128xf32>
    %38 = arith.addf %36, %37 : vector<16x128xf32>
    %39 = math.tanh %38 : vector<16x128xf32>
    %40 = arith.truncf %39 : vector<16x128xf32> to vector<16x128xbf16>
    %cst_27 = arith.constant dense<0.000000e+00> : vector<16x128xf32>
    %41 = tpu.matmul %31, %33, %cst_27 {dimension_numbers = #tpu.dot_dimension_numbers<[1], [0], [0], [1], [0, 0, 1, 1], [], []>} : vector<16x128xbf16>, vector<128x128xbf16>, vector<16x128xf32> -> vector<16x128xf32>
    %42 = vector.broadcast %35 : vector<1x128xf32> to vector<16x128xf32>
    %43 = arith.addf %41, %42 : vector<16x128xf32>
    %44 = math.tanh %43 : vector<16x128xf32>
    %45 = arith.truncf %44 : vector<16x128xf32> to vector<16x128xbf16>
    %c2 = arith.constant 2 : index
    %c0_28 = arith.constant 0 : index
    %c0_29 = arith.constant 0 : index
    %46 = vector.load %arg4[%c2, %c0_28, %c0_29] : memref<9x128x128xbf16, #tpu.memory_space<vmem>>, vector<1x128x128xbf16>
    %47 = vector.shape_cast %46 : vector<1x128x128xbf16> to vector<128x128xbf16>
    %c2_30 = arith.constant 2 : index
    %c0_31 = arith.constant 0 : index
    %c0_32 = arith.constant 0 : index
    %48 = vector.load %arg5[%c2_30, %c0_31, %c0_32] : memref<9x1x128xf32, #tpu.memory_space<vmem>>, vector<1x1x128xf32>
    %49 = vector.shape_cast %48 : vector<1x1x128xf32> to vector<1x128xf32>
    %cst_33 = arith.constant dense<0.000000e+00> : vector<16x128xf32>
    %50 = tpu.matmul %40, %47, %cst_33 {dimension_numbers = #tpu.dot_dimension_numbers<[1], [0], [0], [1], [0, 0, 1, 1], [], []>} : vector<16x128xbf16>, vector<128x128xbf16>, vector<16x128xf32> -> vector<16x128xf32>
    %51 = vector.broadcast %49 : vector<1x128xf32> to vector<16x128xf32>
    %52 = arith.addf %50, %51 : vector<16x128xf32>
    %53 = math.tanh %52 : vector<16x128xf32>
    %54 = arith.truncf %53 : vector<16x128xf32> to vector<16x128xbf16>
    %cst_34 = arith.constant dense<0.000000e+00> : vector<16x128xf32>
    %55 = tpu.matmul %45, %47, %cst_34 {dimension_numbers = #tpu.dot_dimension_numbers<[1], [0], [0], [1], [0, 0, 1, 1], [], []>} : vector<16x128xbf16>, vector<128x128xbf16>, vector<16x128xf32> -> vector<16x128xf32>
    %56 = vector.broadcast %49 : vector<1x128xf32> to vector<16x128xf32>
    %57 = arith.addf %55, %56 : vector<16x128xf32>
    %58 = math.tanh %57 : vector<16x128xf32>
    %59 = arith.truncf %58 : vector<16x128xf32> to vector<16x128xbf16>
    %c3 = arith.constant 3 : index
    %c0_35 = arith.constant 0 : index
    %c0_36 = arith.constant 0 : index
    %60 = vector.load %arg4[%c3, %c0_35, %c0_36] : memref<9x128x128xbf16, #tpu.memory_space<vmem>>, vector<1x128x128xbf16>
    %61 = vector.shape_cast %60 : vector<1x128x128xbf16> to vector<128x128xbf16>
    %c3_37 = arith.constant 3 : index
    %c0_38 = arith.constant 0 : index
    %c0_39 = arith.constant 0 : index
    %62 = vector.load %arg5[%c3_37, %c0_38, %c0_39] : memref<9x1x128xf32, #tpu.memory_space<vmem>>, vector<1x1x128xf32>
    %63 = vector.shape_cast %62 : vector<1x1x128xf32> to vector<1x128xf32>
    %cst_40 = arith.constant dense<0.000000e+00> : vector<16x128xf32>
    %64 = tpu.matmul %54, %61, %cst_40 {dimension_numbers = #tpu.dot_dimension_numbers<[1], [0], [0], [1], [0, 0, 1, 1], [], []>} : vector<16x128xbf16>, vector<128x128xbf16>, vector<16x128xf32> -> vector<16x128xf32>
    %65 = vector.broadcast %63 : vector<1x128xf32> to vector<16x128xf32>
    %66 = arith.addf %64, %65 : vector<16x128xf32>
    %67 = math.tanh %66 : vector<16x128xf32>
    %68 = arith.truncf %67 : vector<16x128xf32> to vector<16x128xbf16>
    %cst_41 = arith.constant dense<0.000000e+00> : vector<16x128xf32>
    %69 = tpu.matmul %59, %61, %cst_41 {dimension_numbers = #tpu.dot_dimension_numbers<[1], [0], [0], [1], [0, 0, 1, 1], [], []>} : vector<16x128xbf16>, vector<128x128xbf16>, vector<16x128xf32> -> vector<16x128xf32>
    %70 = vector.broadcast %63 : vector<1x128xf32> to vector<16x128xf32>
    %71 = arith.addf %69, %70 : vector<16x128xf32>
    %72 = math.tanh %71 : vector<16x128xf32>
    %73 = arith.truncf %72 : vector<16x128xf32> to vector<16x128xbf16>
    %c4 = arith.constant 4 : index
    %c0_42 = arith.constant 0 : index
    %c0_43 = arith.constant 0 : index
    %74 = vector.load %arg4[%c4, %c0_42, %c0_43] : memref<9x128x128xbf16, #tpu.memory_space<vmem>>, vector<1x128x128xbf16>
    %75 = vector.shape_cast %74 : vector<1x128x128xbf16> to vector<128x128xbf16>
    %c4_44 = arith.constant 4 : index
    %c0_45 = arith.constant 0 : index
    %c0_46 = arith.constant 0 : index
    %76 = vector.load %arg5[%c4_44, %c0_45, %c0_46] : memref<9x1x128xf32, #tpu.memory_space<vmem>>, vector<1x1x128xf32>
    %77 = vector.shape_cast %76 : vector<1x1x128xf32> to vector<1x128xf32>
    %cst_47 = arith.constant dense<0.000000e+00> : vector<16x128xf32>
    %78 = tpu.matmul %68, %75, %cst_47 {dimension_numbers = #tpu.dot_dimension_numbers<[1], [0], [0], [1], [0, 0, 1, 1], [], []>} : vector<16x128xbf16>, vector<128x128xbf16>, vector<16x128xf32> -> vector<16x128xf32>
    %79 = vector.broadcast %77 : vector<1x128xf32> to vector<16x128xf32>
    %80 = arith.addf %78, %79 : vector<16x128xf32>
    %81 = math.tanh %80 : vector<16x128xf32>
    %82 = arith.truncf %81 : vector<16x128xf32> to vector<16x128xbf16>
    %cst_48 = arith.constant dense<0.000000e+00> : vector<16x128xf32>
    %83 = tpu.matmul %73, %75, %cst_48 {dimension_numbers = #tpu.dot_dimension_numbers<[1], [0], [0], [1], [0, 0, 1, 1], [], []>} : vector<16x128xbf16>, vector<128x128xbf16>, vector<16x128xf32> -> vector<16x128xf32>
    %84 = vector.broadcast %77 : vector<1x128xf32> to vector<16x128xf32>
    %85 = arith.addf %83, %84 : vector<16x128xf32>
    %86 = math.tanh %85 : vector<16x128xf32>
    %87 = arith.truncf %86 : vector<16x128xf32> to vector<16x128xbf16>
    %c5 = arith.constant 5 : index
    %c0_49 = arith.constant 0 : index
    %c0_50 = arith.constant 0 : index
    %88 = vector.load %arg4[%c5, %c0_49, %c0_50] : memref<9x128x128xbf16, #tpu.memory_space<vmem>>, vector<1x128x128xbf16>
    %89 = vector.shape_cast %88 : vector<1x128x128xbf16> to vector<128x128xbf16>
    %c5_51 = arith.constant 5 : index
    %c0_52 = arith.constant 0 : index
    %c0_53 = arith.constant 0 : index
    %90 = vector.load %arg5[%c5_51, %c0_52, %c0_53] : memref<9x1x128xf32, #tpu.memory_space<vmem>>, vector<1x1x128xf32>
    %91 = vector.shape_cast %90 : vector<1x1x128xf32> to vector<1x128xf32>
    %cst_54 = arith.constant dense<0.000000e+00> : vector<16x128xf32>
    %92 = tpu.matmul %82, %89, %cst_54 {dimension_numbers = #tpu.dot_dimension_numbers<[1], [0], [0], [1], [0, 0, 1, 1], [], []>} : vector<16x128xbf16>, vector<128x128xbf16>, vector<16x128xf32> -> vector<16x128xf32>
    %93 = vector.broadcast %91 : vector<1x128xf32> to vector<16x128xf32>
    %94 = arith.addf %92, %93 : vector<16x128xf32>
    %95 = math.tanh %94 : vector<16x128xf32>
    %96 = arith.truncf %95 : vector<16x128xf32> to vector<16x128xbf16>
    %cst_55 = arith.constant dense<0.000000e+00> : vector<16x128xf32>
    %97 = tpu.matmul %87, %89, %cst_55 {dimension_numbers = #tpu.dot_dimension_numbers<[1], [0], [0], [1], [0, 0, 1, 1], [], []>} : vector<16x128xbf16>, vector<128x128xbf16>, vector<16x128xf32> -> vector<16x128xf32>
    %98 = vector.broadcast %91 : vector<1x128xf32> to vector<16x128xf32>
    %99 = arith.addf %97, %98 : vector<16x128xf32>
    %100 = math.tanh %99 : vector<16x128xf32>
    %101 = arith.truncf %100 : vector<16x128xf32> to vector<16x128xbf16>
    %c6 = arith.constant 6 : index
    %c0_56 = arith.constant 0 : index
    %c0_57 = arith.constant 0 : index
    %102 = vector.load %arg4[%c6, %c0_56, %c0_57] : memref<9x128x128xbf16, #tpu.memory_space<vmem>>, vector<1x128x128xbf16>
    %103 = vector.shape_cast %102 : vector<1x128x128xbf16> to vector<128x128xbf16>
    %c6_58 = arith.constant 6 : index
    %c0_59 = arith.constant 0 : index
    %c0_60 = arith.constant 0 : index
    %104 = vector.load %arg5[%c6_58, %c0_59, %c0_60] : memref<9x1x128xf32, #tpu.memory_space<vmem>>, vector<1x1x128xf32>
    %105 = vector.shape_cast %104 : vector<1x1x128xf32> to vector<1x128xf32>
    %cst_61 = arith.constant dense<0.000000e+00> : vector<16x128xf32>
    %106 = tpu.matmul %96, %103, %cst_61 {dimension_numbers = #tpu.dot_dimension_numbers<[1], [0], [0], [1], [0, 0, 1, 1], [], []>} : vector<16x128xbf16>, vector<128x128xbf16>, vector<16x128xf32> -> vector<16x128xf32>
    %107 = vector.broadcast %105 : vector<1x128xf32> to vector<16x128xf32>
    %108 = arith.addf %106, %107 : vector<16x128xf32>
    %109 = math.tanh %108 : vector<16x128xf32>
    %110 = arith.truncf %109 : vector<16x128xf32> to vector<16x128xbf16>
    %cst_62 = arith.constant dense<0.000000e+00> : vector<16x128xf32>
    %111 = tpu.matmul %101, %103, %cst_62 {dimension_numbers = #tpu.dot_dimension_numbers<[1], [0], [0], [1], [0, 0, 1, 1], [], []>} : vector<16x128xbf16>, vector<128x128xbf16>, vector<16x128xf32> -> vector<16x128xf32>
    %112 = vector.broadcast %105 : vector<1x128xf32> to vector<16x128xf32>
    %113 = arith.addf %111, %112 : vector<16x128xf32>
    %114 = math.tanh %113 : vector<16x128xf32>
    %115 = arith.truncf %114 : vector<16x128xf32> to vector<16x128xbf16>
    %c7 = arith.constant 7 : index
    %c0_63 = arith.constant 0 : index
    %c0_64 = arith.constant 0 : index
    %116 = vector.load %arg4[%c7, %c0_63, %c0_64] : memref<9x128x128xbf16, #tpu.memory_space<vmem>>, vector<1x128x128xbf16>
    %117 = vector.shape_cast %116 : vector<1x128x128xbf16> to vector<128x128xbf16>
    %c7_65 = arith.constant 7 : index
    %c0_66 = arith.constant 0 : index
    %c0_67 = arith.constant 0 : index
    %118 = vector.load %arg5[%c7_65, %c0_66, %c0_67] : memref<9x1x128xf32, #tpu.memory_space<vmem>>, vector<1x1x128xf32>
    %119 = vector.shape_cast %118 : vector<1x1x128xf32> to vector<1x128xf32>
    %cst_68 = arith.constant dense<0.000000e+00> : vector<16x128xf32>
    %120 = tpu.matmul %110, %117, %cst_68 {dimension_numbers = #tpu.dot_dimension_numbers<[1], [0], [0], [1], [0, 0, 1, 1], [], []>} : vector<16x128xbf16>, vector<128x128xbf16>, vector<16x128xf32> -> vector<16x128xf32>
    %121 = vector.broadcast %119 : vector<1x128xf32> to vector<16x128xf32>
    %122 = arith.addf %120, %121 : vector<16x128xf32>
    %123 = math.tanh %122 : vector<16x128xf32>
    %124 = arith.truncf %123 : vector<16x128xf32> to vector<16x128xbf16>
    %cst_69 = arith.constant dense<0.000000e+00> : vector<16x128xf32>
    %125 = tpu.matmul %115, %117, %cst_69 {dimension_numbers = #tpu.dot_dimension_numbers<[1], [0], [0], [1], [0, 0, 1, 1], [], []>} : vector<16x128xbf16>, vector<128x128xbf16>, vector<16x128xf32> -> vector<16x128xf32>
    %126 = vector.broadcast %119 : vector<1x128xf32> to vector<16x128xf32>
    %127 = arith.addf %125, %126 : vector<16x128xf32>
    %128 = math.tanh %127 : vector<16x128xf32>
    %129 = arith.truncf %128 : vector<16x128xf32> to vector<16x128xbf16>
    %c8 = arith.constant 8 : index
    %c0_70 = arith.constant 0 : index
    %c0_71 = arith.constant 0 : index
    %130 = vector.load %arg4[%c8, %c0_70, %c0_71] : memref<9x128x128xbf16, #tpu.memory_space<vmem>>, vector<1x128x128xbf16>
    %131 = vector.shape_cast %130 : vector<1x128x128xbf16> to vector<128x128xbf16>
    %c8_72 = arith.constant 8 : index
    %c0_73 = arith.constant 0 : index
    %c0_74 = arith.constant 0 : index
    %132 = vector.load %arg5[%c8_72, %c0_73, %c0_74] : memref<9x1x128xf32, #tpu.memory_space<vmem>>, vector<1x1x128xf32>
    %133 = vector.shape_cast %132 : vector<1x1x128xf32> to vector<1x128xf32>
    %cst_75 = arith.constant dense<0.000000e+00> : vector<16x128xf32>
    %134 = tpu.matmul %124, %131, %cst_75 {dimension_numbers = #tpu.dot_dimension_numbers<[1], [0], [0], [1], [0, 0, 1, 1], [], []>} : vector<16x128xbf16>, vector<128x128xbf16>, vector<16x128xf32> -> vector<16x128xf32>
    %135 = vector.broadcast %133 : vector<1x128xf32> to vector<16x128xf32>
    %136 = arith.addf %134, %135 : vector<16x128xf32>
    %137 = math.tanh %136 : vector<16x128xf32>
    %138 = arith.truncf %137 : vector<16x128xf32> to vector<16x128xbf16>
    %cst_76 = arith.constant dense<0.000000e+00> : vector<16x128xf32>
    %139 = tpu.matmul %129, %131, %cst_76 {dimension_numbers = #tpu.dot_dimension_numbers<[1], [0], [0], [1], [0, 0, 1, 1], [], []>} : vector<16x128xbf16>, vector<128x128xbf16>, vector<16x128xf32> -> vector<16x128xf32>
    %140 = vector.broadcast %133 : vector<1x128xf32> to vector<16x128xf32>
    %141 = arith.addf %139, %140 : vector<16x128xf32>
    %142 = math.tanh %141 : vector<16x128xf32>
    %143 = arith.truncf %142 : vector<16x128xf32> to vector<16x128xbf16>
    %cst_77 = arith.constant dense<0.000000e+00> : vector<16x128xf32>
    %144 = tpu.matmul %138, %2, %cst_77 {dimension_numbers = #tpu.dot_dimension_numbers<[1], [0], [0], [1], [0, 0, 1, 1], [], []>} : vector<16x128xbf16>, vector<128x128xbf16>, vector<16x128xf32> -> vector<16x128xf32>
    %145 = vector.broadcast %3 : vector<1x128xf32> to vector<16x128xf32>
    %146 = arith.addf %144, %145 : vector<16x128xf32>
    %147 = arith.truncf %146 : vector<16x128xf32> to vector<16x128xbf16>
    %c0_78 = arith.constant 0 : index
    %c0_79 = arith.constant 0 : index
    %148 = vector.load %arg8[%c0_78, %c0_79] : memref<32x128xbf16, #tpu.memory_space<vmem>>, vector<16x128xbf16>
    tpu.vector_store %arg8[%c0_78, %c0_79], %147 {strides = array<i32>} : memref<32x128xbf16, #tpu.memory_space<vmem>>, vector<16x128xbf16>,
    %cst_80 = arith.constant dense<0.000000e+00> : vector<16x128xf32>
    %149 = tpu.matmul %143, %2, %cst_80 {dimension_numbers = #tpu.dot_dimension_numbers<[1], [0], [0], [1], [0, 0, 1, 1], [], []>} : vector<16x128xbf16>, vector<128x128xbf16>, vector<16x128xf32> -> vector<16x128xf32>
    %150 = vector.broadcast %3 : vector<1x128xf32> to vector<16x128xf32>
    %151 = arith.addf %149, %150 : vector<16x128xf32>
    %152 = arith.truncf %151 : vector<16x128xf32> to vector<16x128xbf16>
    %c16_81 = arith.constant 16 : index
    %c0_82 = arith.constant 0 : index
    %153 = vector.load %arg8[%c16_81, %c0_82] : memref<32x128xbf16, #tpu.memory_space<vmem>>, vector<16x128xbf16>
    tpu.vector_store %arg8[%c16_81, %c0_82], %152 {strides = array<i32>} : memref<32x128xbf16, #tpu.memory_space<vmem>>, vector<16x128xbf16>,
    return
  }
  func.func @transform_0(%arg0: i32) -> (i32, i32) {
    %c0_i32 = arith.constant 0 : i32
    %c0_i32_0 = arith.constant 0 : i32
    return %arg0, %c0_i32 : i32, i32
  }
  func.func @transform_1(%arg0: i32) -> (i32, i32) {
    %c0_i32 = arith.constant 0 : i32
    %c0_i32_0 = arith.constant 0 : i32
    %c0_i32_1 = arith.constant 0 : i32
    return %c0_i32, %c0_i32_0 : i32, i32
  }
  func.func @transform_2(%arg0: i32) -> (i32, i32) {
    %c0_i32 = arith.constant 0 : i32
    %c0_i32_0 = arith.constant 0 : i32
    %c0_i32_1 = arith.constant 0 : i32
    return %c0_i32, %c0_i32_0 : i32, i32
  }
  func.func @transform_3(%arg0: i32) -> (i32, i32, i32) {
    %c0_i32 = arith.constant 0 : i32
    %c0_i32_0 = arith.constant 0 : i32
    %c0_i32_1 = arith.constant 0 : i32
    %c0_i32_2 = arith.constant 0 : i32
    return %c0_i32, %c0_i32_0, %c0_i32_1 : i32, i32, i32
  }
  func.func @transform_4(%arg0: i32) -> (i32, i32, i32) {
    %c0_i32 = arith.constant 0 : i32
    %c0_i32_0 = arith.constant 0 : i32
    %c0_i32_1 = arith.constant 0 : i32
    %c0_i32_2 = arith.constant 0 : i32
    return %c0_i32, %c0_i32_0, %c0_i32_1 : i32, i32, i32
  }
  func.func @transform_5(%arg0: i32) -> (i32, i32) {
    %c0_i32 = arith.constant 0 : i32
    %c0_i32_0 = arith.constant 0 : i32
    %c0_i32_1 = arith.constant 0 : i32
    return %c0_i32, %c0_i32_0 : i32, i32
  }
  func.func @transform_6(%arg0: i32) -> (i32, i32) {
    %c0_i32 = arith.constant 0 : i32
    %c0_i32_0 = arith.constant 0 : i32
    %c0_i32_1 = arith.constant 0 : i32
    return %c0_i32, %c0_i32_0 : i32, i32
  }
  func.func @transform_7(%arg0: i32) -> (i32, i32) {
    %c0_i32 = arith.constant 0 : i32
    %c0_i32_0 = arith.constant 0 : i32
    return %arg0, %c0_i32 : i32, i32
  }
}

</mosaic_0001>

<llo_original>
// kernel: deep_binary_net.1
$region0: #{deep_binary_net.1}
  #allocation0 [shape = 'u32[]', space=smem, size = 0x4, offset = 0x4, fixed_abs, tag = 'smem constant byte address 0x4 - core index']
  #allocation1 [shape = 'u32[144,128]{1,0:T(1,128)}', space=vmem, size = 0x12000, scoped, tag = 'internal scratch']
  %s0 = inlined_call_operand.vmem [shape: bf16[64,32], index: 0, kind: input, shape index: {}]
  %s1 = inlined_call_operand.vmem [shape: bf16[32,128], index: 1, kind: input, shape index: {}]
  %s2 = inlined_call_operand.vmem [shape: f32[1,128], index: 2, kind: input, shape index: {}]
  %s3 = inlined_call_operand.hbm [shape: bf16[9,128,128], index: 3, kind: input, shape index: {}]
  %s4 = inlined_call_operand.vmem [shape: f32[9,1,128], index: 4, kind: input, shape index: {}]
  %s5 = inlined_call_operand.hbm [shape: bf16[128,128], index: 5, kind: input, shape index: {}]
  %s6 = inlined_call_operand.vmem [shape: f32[1,128], index: 6, kind: input, shape index: {}]
  %s7 = inlined_call_operand.vmem [shape: bf16[64,128], index: 7, kind: output, shape index: {}]
  %s8 = sld [smem:[#allocation0]]
  $region69: #{deep_binary_net.1} parent=0
    _
  %s10 = ssub.s32 1, %s8
  %s11 = scalar_select 0, %s10, %s8
  $region1: #{deep_binary_net.1} parent=0
    #allocation2 [shape = 'u8[294912]{0}', space=vmem, size = 0x48000, scoped, tag = 'input window, operand 3, single buffered']
    #allocation3 [shape = 's32[2]{0}', space=sflag, size = 0x8, scoped, tag = 'scoped memory for deep_binary_net.1']
    #allocation4 [shape = 'u8[32768]{0}', space=vmem, size = 0x8000, scoped, tag = 'input window, operand 5, single buffered']
    #allocation5 [shape = 's32[1]{0}', space=sflag, size = 0x4, scoped, tag = 'scoped memory for deep_binary_net.1']
    %12 = vsyncpa [#allocation3], 0
    %13 = vsyncpa [#allocation5], 0
    loop: start=0, step=1, limit=4
    $region2: #{deep_binary_net.1} parent=1 // loop_pre_header
      _
    $region3: #{deep_binary_net.1} parent=1 // loop_header
      %s15 = sphi 0, %s19
      %p16 = scmp.ge.s32.totalorder %s15, 4
      %s25 = sphi 0, %s27
      %s28 = sphi 0, %s25
      %s29 = sphi 0, %s28
      %s45 = sphi 0, %s29
      %s49 = sphi 0, %s49
      %s51 = sphi 0, %s49
      %s52 = sphi 0, %s51
      %s66 = sphi 0, %s52
      %s70 = sphi 0, %s70
      %s72 = sphi 0, %s70
      %s73 = sphi 0, %s72
      %s87 = sphi 0, %s73
      %s91 = sphi 0, %s91
      %s93 = sphi 0, %s91
      %s94 = sphi 0, %s93
      %s108 = sphi 0, %s94
      %s112 = sphi 0, %s112
      %s114 = sphi 0, %s112
      %s115 = sphi 0, %s114
      %s129 = sphi 0, %s115
      %s133 = sphi 0, %s133
      %s135 = sphi 0, %s133
      %s136 = sphi 0, %s135
      %s150 = sphi 0, %s136
      %s154 = sphi 0, %s154
      %s156 = sphi 0, %s154
      %s157 = sphi 0, %s156
      %s171 = sphi 0, %s157
      %s177 = sphi 0, %s179
      %s180 = sphi 0, %s177
      %s181 = sphi 0, %s180
      %s197 = sphi 0, %s181
    $region4: #{deep_binary_net.1} parent=1 // loop_header_branch
      %18 = sbr.rel (%p16) target = $region8
    $region5: #{deep_binary_net.1} parent=1 // loop_body
      %s20 = ssub.s32 %s15, 1
      %s21 = ssub.s32 %s15, 2
      %s22 = sadd.s32 %s15, 1
      %s23 = ssub.s32 %s15, %s22
      %p24 = scmp.eq.s32.totalorder %s23, 0
      %s26 = sadd.s32 %s25, 1
      %s27 = scalar_select %p24, %s25, %s26
      %p30 = pneg %p24
      %p31 = scmp.eq.s32.totalorder %s15, 1
      %p32 = por %p30, %p31
      %p33 = scmp.ne.s32.totalorder %s25, %s28
      %p34 = scmp.eq.s32.totalorder %s15, 0
      %p35 = por %p33, %p34
      %p36 = scmp.ne.s32.totalorder %s25, %s28
      %p37 = scmp.eq.s32.totalorder %s20, 1
      %p38 = por %p36, %p37
      %p39 = scmp.ne.s32.totalorder %s28, %s29
      %p40 = scmp.eq.s32.totalorder %s20, 0
      %p41 = por %p39, %p40
      %p42 = scmp.ne.s32.totalorder %s28, %s29
      %p43 = scmp.eq.s32.totalorder %s21, 1
      %p44 = por %p42, %p43
      %p46 = scmp.ne.s32.totalorder %s29, %s45
      %p47 = scmp.eq.s32.totalorder %s21, 0
      %p48 = por %p46, %p47
      %s50 = sadd.s32 %s49, 1
      %p53 = scmp.eq.s32.totalorder %s15, 1
      %p54 = scmp.ne.s32.totalorder %s49, %s51
      %p55 = scmp.eq.s32.totalorder %s15, 0
      %p56 = por %p54, %p55
      %p57 = scmp.ne.s32.totalorder %s49, %s51
      %p58 = scmp.eq.s32.totalorder %s20, 1
      %p59 = por %p57, %p58
      %p60 = scmp.ne.s32.totalorder %s51, %s52
      %p61 = scmp.eq.s32.totalorder %s20, 0
      %p62 = por %p60, %p61
      %p63 = scmp.ne.s32.totalorder %s51, %s52
      %p64 = scmp.eq.s32.totalorder %s21, 1
      %p65 = por %p63, %p64
      %p67 = scmp.ne.s32.totalorder %s52, %s66
      %p68 = scmp.eq.s32.totalorder %s21, 0
      %p69 = por %p67, %p68
      %s71 = sadd.s32 %s70, 1
      %p74 = scmp.eq.s32.totalorder %s15, 1
      %p75 = scmp.ne.s32.totalorder %s70, %s72
      %p76 = scmp.eq.s32.totalorder %s15, 0
      %p77 = por %p75, %p76
      %p78 = scmp.ne.s32.totalorder %s70, %s72
      %p79 = scmp.eq.s32.totalorder %s20, 1
      %p80 = por %p78, %p79
      %p81 = scmp.ne.s32.totalorder %s72, %s73
      %p82 = scmp.eq.s32.totalorder %s20, 0
      %p83 = por %p81, %p82
      %p84 = scmp.ne.s32.totalorder %s72, %s73
      %p85 = scmp.eq.s32.totalorder %s21, 1
      %p86 = por %p84, %p85
      %p88 = scmp.ne.s32.totalorder %s73, %s87
      %p89 = scmp.eq.s32.totalorder %s21, 0
      %p90 = por %p88, %p89
      %s92 = sadd.s32 %s91, 1
      %p95 = scmp.eq.s32.totalorder %s15, 1
      %p96 = scmp.ne.s32.totalorder %s91, %s93
      %p97 = scmp.eq.s32.totalorder %s15, 0
      %p98 = por %p96, %p97
      %p99 = scmp.ne.s32.totalorder %s91, %s93
      %p100 = scmp.eq.s32.totalorder %s20, 1
      %p101 = por %p99, %p100
      %p102 = scmp.ne.s32.totalorder %s93, %s94
      %p103 = scmp.eq.s32.totalorder %s20, 0
      %p104 = por %p102, %p103
      %p105 = scmp.ne.s32.totalorder %s93, %s94
      %p106 = scmp.eq.s32.totalorder %s21, 1
      %p107 = por %p105, %p106
      %p109 = scmp.ne.s32.totalorder %s94, %s108
      %p110 = scmp.eq.s32.totalorder %s21, 0
      %p111 = por %p109, %p110
      %s113 = sadd.s32 %s112, 1
      %p116 = scmp.eq.s32.totalorder %s15, 1
      %p117 = scmp.ne.s32.totalorder %s112, %s114
      %p118 = scmp.eq.s32.totalorder %s15, 0
      %p119 = por %p117, %p118
      %p120 = scmp.ne.s32.totalorder %s112, %s114
      %p121 = scmp.eq.s32.totalorder %s20, 1
      %p122 = por %p120, %p121
      %p123 = scmp.ne.s32.totalorder %s114, %s115
      %p124 = scmp.eq.s32.totalorder %s20, 0
      %p125 = por %p123, %p124
      %p126 = scmp.ne.s32.totalorder %s114, %s115
      %p127 = scmp.eq.s32.totalorder %s21, 1
      %p128 = por %p126, %p127
      %p130 = scmp.ne.s32.totalorder %s115, %s129
      %p131 = scmp.eq.s32.totalorder %s21, 0
      %p132 = por %p130, %p131
      %s134 = sadd.s32 %s133, 1
      %p137 = scmp.eq.s32.totalorder %s15, 1
      %p138 = scmp.ne.s32.totalorder %s133, %s135
      %p139 = scmp.eq.s32.totalorder %s15, 0
      %p140 = por %p138, %p139
      %p141 = scmp.ne.s32.totalorder %s133, %s135
      %p142 = scmp.eq.s32.totalorder %s20, 1
      %p143 = por %p141, %p142
      %p144 = scmp.ne.s32.totalorder %s135, %s136
      %p145 = scmp.eq.s32.totalorder %s20, 0
      %p146 = por %p144, %p145
      %p147 = scmp.ne.s32.totalorder %s135, %s136
      %p148 = scmp.eq.s32.totalorder %s21, 1
      %p149 = por %p147, %p148
      %p151 = scmp.ne.s32.totalorder %s136, %s150
      %p152 = scmp.eq.s32.totalorder %s21, 0
      %p153 = por %p151, %p152
      %s155 = sadd.s32 %s154, 1
      %p158 = scmp.eq.s32.totalorder %s15, 1
      %p159 = scmp.ne.s32.totalorder %s154, %s156
      %p160 = scmp.eq.s32.totalorder %s15, 0
      %p161 = por %p159, %p160
      %p162 = scmp.ne.s32.totalorder %s154, %s156
      %p163 = scmp.eq.s32.totalorder %s20, 1
      %p164 = por %p162, %p163
      %p165 = scmp.ne.s32.totalorder %s156, %s157
      %p166 = scmp.eq.s32.totalorder %s20, 0
      %p167 = por %p165, %p166
      %p168 = scmp.ne.s32.totalorder %s156, %s157
      %p169 = scmp.eq.s32.totalorder %s21, 1
      %p170 = por %p168, %p169
      %p172 = scmp.ne.s32.totalorder %s157, %s171
      %p173 = scmp.eq.s32.totalorder %s21, 0
      %p174 = por %p172, %p173
      %s175 = ssub.s32 %s15, %s22
      %p176 = scmp.eq.s32.totalorder %s175, 0
      %s178 = sadd.s32 %s177, 1
      %s179 = scalar_select %p176, %s177, %s178
      %p182 = pneg %p176
      %p183 = scmp.eq.s32.totalorder %s15, 1
      %p184 = por %p182, %p183
      %p185 = scmp.ne.s32.totalorder %s177, %s180
      %p186 = scmp.eq.s32.totalorder %s15, 0
      %p187 = por %p185, %p186
      %p188 = scmp.ne.s32.totalorder %s177, %s180
      %p189 = scmp.eq.s32.totalorder %s20, 1
      %p190 = por %p188, %p189
      %p191 = scmp.ne.s32.totalorder %s180, %s181
      %p192 = scmp.eq.s32.totalorder %s20, 0
      %p193 = por %p191, %p192
      %p194 = scmp.ne.s32.totalorder %s180, %s181
      %p195 = scmp.eq.s32.totalorder %s21, 1
      %p196 = por %p194, %p195
      %p198 = scmp.ne.s32.totalorder %s181, %s197
      %p199 = scmp.eq.s32.totalorder %s21, 0
      %p200 = por %p198, %p199
      %p201 = scmp.le.s32.totalorder 1, %s15
      %p202 = scmp.lt.s32.totalorder %s15, 3
      %p203 = pnand %p201, %p202
      %p204 = pneg %p203
      // Predicated region
      $region9: #{deep_binary_net.1} parent=5 // pred_check
        _
      $region10: #{deep_binary_net.1} parent=5 // pred_check_branch
        %206 = sbr.rel (%p203) target = $region12
      $region11: #{deep_binary_net.1} parent=5 // pred_region
        %s207 = ssub.s32 %s15, 1
        // Predicated region
        $region13: #{deep_binary_net.1} parent=11 // pred_check
          %p208 = pneg %p62
        $region14: #{deep_binary_net.1} parent=11 // pred_check_branch
          %210 = sbr.rel (%p208) target = $region16
        $region15: #{deep_binary_net.1} parent=11 // pred_region
          _
        $region16: #{deep_binary_net.1} parent=11 // pred_fallthru
          _
        // Predicated region
        $region17: #{deep_binary_net.1} parent=11 // pred_check
          %p211 = pneg %p83
        $region18: #{deep_binary_net.1} parent=11 // pred_check_branch
          %213 = sbr.rel (%p211) target = $region20
        $region19: #{deep_binary_net.1} parent=11 // pred_region
          _
        $region20: #{deep_binary_net.1} parent=11 // pred_fallthru
          _
        // Predicated region
        $region21: #{deep_binary_net.1} parent=11 // pred_check
          %p214 = pneg %p104
        $region22: #{deep_binary_net.1} parent=11 // pred_check_branch
          %216 = sbr.rel (%p214) target = $region24
        $region23: #{deep_binary_net.1} parent=11 // pred_region
          %s218 = ssub.s32 9216, 9216
          %219 = vsyncadd [#allocation3], %s218
          %s220 = sshll.u32 [#allocation2], 4
          %s221 = int_to_ptr.vmem [resolvable:$true] %s220
          %226 = dma.hbm_to_vmem [thread:$0]  %s3, 9216, %s221, [#allocation3], 64, 64, 4
        $region24: #{deep_binary_net.1} parent=11 // pred_fallthru
          _
        // Predicated region
        $region25: #{deep_binary_net.1} parent=11 // pred_check
          %p227 = pneg %p125
        $region26: #{deep_binary_net.1} parent=11 // pred_check_branch
          %229 = sbr.rel (%p227) target = $region28
        $region27: #{deep_binary_net.1} parent=11 // pred_region
          _
        $region28: #{deep_binary_net.1} parent=11 // pred_fallthru
          _
        // Predicated region
        $region29: #{deep_binary_net.1} parent=11 // pred_check
          %p230 = pneg %p146
        $region30: #{deep_binary_net.1} parent=11 // pred_check_branch
          %232 = sbr.rel (%p230) target = $region32
        $region31: #{deep_binary_net.1} parent=11 // pred_region
          %s234 = ssub.s32 1024, 1024
          %235 = vsyncadd [#allocation5], %s234
          %s236 = sshll.u32 [#allocation4], 4
          %s237 = int_to_ptr.vmem [resolvable:$true] %s236
          %242 = dma.hbm_to_vmem [thread:$0]  %s5, 1024, %s237, [#allocation5], 64, 64, 4
        $region32: #{deep_binary_net.1} parent=11 // pred_fallthru
          _
        // Predicated region
        $region33: #{deep_binary_net.1} parent=11 // pred_check
          %p243 = pneg %p167
        $region34: #{deep_binary_net.1} parent=11 // pred_check_branch
          %245 = sbr.rel (%p243) target = $region36
        $region35: #{deep_binary_net.1} parent=11 // pred_region
          _
        $region36: #{deep_binary_net.1} parent=11 // pred_fallthru
          _
      $region12: #{deep_binary_net.1} parent=5 // pred_fallthru
        _
      %p246 = scmp.lt.s32.totalorder %s15, 2
      // Predicated region
      $region37: #{deep_binary_net.1} parent=5 // pred_check
        %p247 = pneg %p246
      $region38: #{deep_binary_net.1} parent=5 // pred_check_branch
        %249 = sbr.rel (%p247) target = $region40
      $region39: #{deep_binary_net.1} parent=5 // pred_region
        // Predicated region
        $region41: #{deep_binary_net.1} parent=39 // pred_check
          %p250 = pneg %p35
        $region42: #{deep_binary_net.1} parent=39 // pred_check_branch
          %252 = sbr.rel (%p250) target = $region44
        $region43: #{deep_binary_net.1} parent=39 // pred_region
          %s253 = smul.u32 4, %s15
          %p254 = scmp.lt.s32.totalorder %s253, 7
          %s255 = scalar_select %p254, %s253, 7
          %s256 = smul.addr %s255, 4
          %s257 = scalar_lea.vmem %s0, %s256
          %s258 = smul.u32 4, %s15
        $region44: #{deep_binary_net.1} parent=39 // pred_fallthru
          _
      $region40: #{deep_binary_net.1} parent=5 // pred_fallthru
        _
      %p259 = scmp.le.s32.totalorder 1, %s15
      %p260 = scmp.lt.s32.totalorder %s15, 3
      %p261 = pnand %p259, %p260
      %p262 = pneg %p261
      // Predicated region
      $region45: #{deep_binary_net.1} parent=5 // pred_check
        _
      $region46: #{deep_binary_net.1} parent=5 // pred_check_branch
        %264 = sbr.rel (%p261) target = $region48
      $region47: #{deep_binary_net.1} parent=5 // pred_region
        %s265 = ssub.s32 %s15, 1
        // Predicated region
        $region49: #{deep_binary_net.1} parent=47 // pred_check
          %p266 = pneg %p104
        $region50: #{deep_binary_net.1} parent=47 // pred_check_branch
          %268 = sbr.rel (%p266) target = $region52
        $region51: #{deep_binary_net.1} parent=47 // pred_region
          %269 = dma.done [#allocation3], 9216
        $region52: #{deep_binary_net.1} parent=47 // pred_fallthru
          _
        // Predicated region
        $region53: #{deep_binary_net.1} parent=47 // pred_check
          %p270 = pneg %p146
        $region54: #{deep_binary_net.1} parent=47 // pred_check_branch
          %272 = sbr.rel (%p270) target = $region56
        $region55: #{deep_binary_net.1} parent=47 // pred_region
          %273 = dma.done [#allocation5], 1024
        $region56: #{deep_binary_net.1} parent=47 // pred_fallthru
          _
        %s274 = smul.u32 4, %s20
        %p275 = scmp.lt.s32.totalorder %s274, 7
        %s276 = scalar_select %p275, %s274, 7
        %s277 = smul.addr %s276, 4
        %s278 = scalar_lea.vmem %s0, %s277
        %p279 = pneg %p41
        %p280 = pneg %p38
        %p281 = pneg %p62
        %p282 = pneg %p59
        %p283 = pneg %p83
        %p284 = pneg %p80
        %p285 = pneg %p104
        %p286 = pneg %p101
        %p287 = pneg %p125
        %p288 = pneg %p122
        %p289 = pneg %p146
        %p290 = pneg %p143
        %p291 = pneg %p167
        %p292 = pneg %p164
        %p293 = pneg %p193
        %p294 = pneg %p190
        %s295 = smul.u32 4, %s20
        %p296 = scmp.lt.s32.totalorder %s295, 7
        %s297 = scalar_select %p296, %s295, 7
        %s298 = smul.addr %s297, 4
        %s299 = scalar_lea.vmem %s7, %s298
        %s300 = smul.u32 4, %s20
        %p301 = scmp.lt.s32.totalorder %s300, 7
        %s302 = scalar_select %p301, %s300, 7
        %s303 = smul.addr %s302, 4
        %s304 = scalar_lea.vmem %s0, %s303
        %s305 = smul.u32 4, %s20
        %s306 = smul.u32 4, %s20
        %p307 = scmp.lt.s32.totalorder %s306, 7
        %s308 = scalar_select %p307, %s306, 7
        %s309 = smul.addr %s308, 4
        %s310 = scalar_lea.vmem %s7, %s309
        %s311 = smul.u32 4, %s20
        %v313 = vld [vmem:[%s1] sm:$0xf]
        %v314 = vld [vmem:[%s1 + $0x4] sm:$0xf]
        %v315 = vld [vmem:[%s1 + $0x8] sm:$0xf]
        %v316 = vld [vmem:[%s1 + $0xc] sm:$0xf]
        %v317 = vld [vmem:[%s2] sm:$0x1]
        %v318 = vld [vmem:[#allocation4] sm:$0xf]
        %v319 = vld [vmem:[#allocation4 + $0x4] sm:$0xf]
        %v320 = vld [vmem:[#allocation4 + $0x8] sm:$0xf]
        %v321 = vld [vmem:[#allocation4 + $0xc] sm:$0xf]
        %v322 = vld [vmem:[#allocation4 + $0x10] sm:$0xf]
        %v323 = vld [vmem:[#allocation4 + $0x14] sm:$0xf]
        %v324 = vld [vmem:[#allocation4 + $0x18] sm:$0xf]
        %v325 = vld [vmem:[#allocation4 + $0x1c] sm:$0xf]
        %v326 = vld [vmem:[#allocation4 + $0x20] sm:$0xf]
        %v327 = vld [vmem:[#allocation4 + $0x24] sm:$0xf]
        %v328 = vld [vmem:[#allocation4 + $0x28] sm:$0xf]
        %v329 = vld [vmem:[#allocation4 + $0x2c] sm:$0xf]
        %v330 = vld [vmem:[#allocation4 + $0x30] sm:$0xf]
        %v331 = vld [vmem:[#allocation4 + $0x34] sm:$0xf]
        %v332 = vld [vmem:[#allocation4 + $0x38] sm:$0xf]
        %v333 = vld [vmem:[#allocation4 + $0x3c] sm:$0xf]
        %v334 = vld [vmem:[%s6] sm:$0x1]
        %v335 = vld [vmem:[%s304] sm:$0xf]
        %v336 = vld [vmem:[%s304 + $0x4] sm:$0xf]
        %v338 = vlaneseq
        %v339 = vshrl.u32 %v338, 7
        %v340 = vsub.s32 0, %v339
        %v341 = vrot.slane %v317, %v340
        %v345 = vunpack.c.l.b16 %v335
        %v346 = vunpack.c.l.b16 %v336
        %v347 = vpack.c.b16 %v346, %v345
        %v352 = vunpack.c.l.b16 %v313
        %v353 = vunpack.c.l.b16 %v314
        %v354 = vunpack.c.l.b16 %v315
        %v355 = vunpack.c.l.b16 %v316
        %v356 = vpack.c.b16 %v353, %v352
        %v357 = vpack.c.b16 %v355, %v354
        %vm360 = vcmask 261120
        %v362 = vsel %vm360, %v347, 0
        %364 = vmatprep.subr.bf16.mxu0 0
        %365 = vmatpush1.bf16.msra.mxu0 0
        %366 = vmatprep.subr.bf16.mxu0 0
        %367 = vmatpush1.bf16.msra.mxu0 0
        %368 = vmatprep.subr.bf16.mxu0 0
        %369 = vmatpush1.bf16.msra.mxu0 0
        %370 = vmatprep.subr.bf16.mxu0 0
        %371 = vmatpush1.bf16.msra.mxu0 0
        %372 = vmatprep.subr.bf16.mxu0 0
        %373 = vmatpush1.bf16.msra.mxu0 0
        %374 = vmatprep.subr.bf16.mxu0 0
        %375 = vmatpush1.bf16.msra.mxu0 0
        %376 = vmatprep.subr.bf16.mxu0 0
        %377 = vmatpush1.bf16.msra.mxu0 %v357
        %378 = vmatprep.subr.bf16.mxu0 0
        %379 = vmatpush1.bf16.msra.mxu0 %v356
        %380 = vmatprep.subr.bf16.mxu0 0
        %381 = vmatpush2.bf16.msra.mxu0 0
        %382 = vmatprep.subr.bf16.mxu0 0
        %383 = vmatpush2.bf16.msra.mxu0 0
        %384 = vmatprep.subr.bf16.mxu0 0
        %385 = vmatpush2.bf16.msra.mxu0 0
        %386 = vmatprep.subr.bf16.mxu0 0
        %387 = vmatpush2.bf16.msra.mxu0 0
        %388 = vmatprep.subr.bf16.mxu0 0
        %389 = vmatpush2.bf16.msra.mxu0 0
        %390 = vmatprep.subr.bf16.mxu0 0
        %391 = vmatpush2.bf16.msra.mxu0 0
        %392 = vmatprep.subr.bf16.mxu0 0
        %393 = vmatpush2.bf16.msra.mxu0 0
        %394 = vmatprep.subr.bf16.mxu0 0
        %395 = vmatpush2.bf16.msra.mxu0 0
        %396 = vmatprep.mubr.bf16.mxu0 0
        %397 = vmatmul.mubr.bf16.gmra.mxu0 %v362
        %v398 = vpop.f32.mrf.mxu0
        %v399 = vadd.f32 %v341, %v398
        %v400 = vpop.f32.mrf.mxu0
        %v401 = vpop.f32.mrf.mxu0
        %v402 = vadd.f32 %v341, %v401
        %v403 = vpop.f32.mrf.mxu0
        %404 = vdwg.mxu0
        %v405 = vmax.f32 %v399, 0.0
        %v406 = vmax.f32 %v402, 0.0
        %v407 = vpack.c.bf16 %v406, %v405
        %v408 = vld [vmem:[%s304 + $0x8] sm:$0xf]
        %v409 = vld [vmem:[%s304 + $0xc] sm:$0xf]
        %v412 = vunpack.c.l.b16 %v408
        %v413 = vunpack.c.l.b16 %v409
        %v414 = vpack.c.b16 %v413, %v412
        %v416 = vsel %vm360, %v414, 0
        %418 = vmatprep.subr.bf16.mxu0 0
        %419 = vmatpush1.bf16.msra.mxu0 0
        %420 = vmatprep.subr.bf16.mxu0 0
        %421 = vmatpush1.bf16.msra.mxu0 0
        %422 = vmatprep.subr.bf16.mxu0 0
        %423 = vmatpush1.bf16.msra.mxu0 0
        %424 = vmatprep.subr.bf16.mxu0 0
        %425 = vmatpush1.bf16.msra.mxu0 0
        %426 = vmatprep.subr.bf16.mxu0 0
        %427 = vmatpush1.bf16.msra.mxu0 0
        %428 = vmatprep.subr.bf16.mxu0 0
        %429 = vmatpush1.bf16.msra.mxu0 0
        %430 = vmatprep.subr.bf16.mxu0 0
        %431 = vmatpush1.bf16.msra.mxu0 %v357
        %432 = vmatprep.subr.bf16.mxu0 0
        %433 = vmatpush1.bf16.msra.mxu0 %v356
        %434 = vmatprep.subr.bf16.mxu0 0
        %435 = vmatpush2.bf16.msra.mxu0 0
        %436 = vmatprep.subr.bf16.mxu0 0
        %437 = vmatpush2.bf16.msra.mxu0 0
        %438 = vmatprep.subr.bf16.mxu0 0
        %439 = vmatpush2.bf16.msra.mxu0 0
        %440 = vmatprep.subr.bf16.mxu0 0
        %441 = vmatpush2.bf16.msra.mxu0 0
        %442 = vmatprep.subr.bf16.mxu0 0
        %443 = vmatpush2.bf16.msra.mxu0 0
        %444 = vmatprep.subr.bf16.mxu0 0
        %445 = vmatpush2.bf16.msra.mxu0 0
        %446 = vmatprep.subr.bf16.mxu0 0
        %447 = vmatpush2.bf16.msra.mxu0 0
        %448 = vmatprep.subr.bf16.mxu0 0
        %449 = vmatpush2.bf16.msra.mxu0 0
        %450 = vmatprep.mubr.bf16.mxu0 0
        %451 = vmatmul.mubr.bf16.gmra.mxu0 %v416
        %v452 = vpop.f32.mrf.mxu0
        %v453 = vadd.f32 %v341, %v452
        %v454 = vpop.f32.mrf.mxu0
        %v455 = vpop.f32.mrf.mxu0
        %v456 = vadd.f32 %v341, %v455
        %v457 = vpop.f32.mrf.mxu0
        %458 = vdwg.mxu0
        %v459 = vmax.f32 %v453, 0.0
        %v460 = vmax.f32 %v456, 0.0
        %v461 = vpack.c.bf16 %v460, %v459
        %v462 = vld [vmem:[#allocation2] sm:$0xf]
        %v463 = vld [vmem:[#allocation2 + $0x4] sm:$0xf]
        %v464 = vld [vmem:[#allocation2 + $0x8] sm:$0xf]
        %v465 = vld [vmem:[#allocation2 + $0xc] sm:$0xf]
        %v466 = vld [vmem:[#allocation2 + $0x10] sm:$0xf]
        %v467 = vld [vmem:[#allocation2 + $0x14] sm:$0xf]
        %v468 = vld [vmem:[#allocation2 + $0x18] sm:$0xf]
        %v469 = vld [vmem:[#allocation2 + $0x1c] sm:$0xf]
        %v470 = vld [vmem:[#allocation2 + $0x20] sm:$0xf]
        %v471 = vld [vmem:[#allocation2 + $0x24] sm:$0xf]
        %v472 = vld [vmem:[#allocation2 + $0x28] sm:$0xf]
        %v473 = vld [vmem:[#allocation2 + $0x2c] sm:$0xf]
        %v474 = vld [vmem:[#allocation2 + $0x30] sm:$0xf]
        %v475 = vld [vmem:[#allocation2 + $0x34] sm:$0xf]
        %v476 = vld [vmem:[#allocation2 + $0x38] sm:$0xf]
        %v477 = vld [vmem:[#allocation2 + $0x3c] sm:$0xf]
        %v478 = vld [vmem:[%s4] sm:$0x1]
        %v480 = vlaneseq
        %v481 = vshrl.u32 %v480, 7
        %v482 = vsub.s32 0, %v481
        %v483 = vrot.slane %v478, %v482
        %v501 = vunpack.c.l.b16 %v462
        %v502 = vunpack.c.l.b16 %v463
        %v503 = vunpack.c.l.b16 %v464
        %v504 = vunpack.c.l.b16 %v465
        %v505 = vunpack.c.l.b16 %v466
        %v506 = vunpack.c.l.b16 %v467
        %v507 = vunpack.c.l.b16 %v468
        %v508 = vunpack.c.l.b16 %v469
        %v509 = vunpack.c.l.b16 %v470
        %v510 = vunpack.c.l.b16 %v471
        %v511 = vunpack.c.l.b16 %v472
        %v512 = vunpack.c.l.b16 %v473
        %v513 = vunpack.c.l.b16 %v474
        %v514 = vunpack.c.l.b16 %v475
        %v515 = vunpack.c.l.b16 %v476
        %v516 = vunpack.c.l.b16 %v477
        %v517 = vpack.c.b16 %v502, %v501
        %v518 = vpack.c.b16 %v504, %v503
        %v519 = vpack.c.b16 %v506, %v505
        %v520 = vpack.c.b16 %v508, %v507
        %v521 = vpack.c.b16 %v510, %v509
        %v522 = vpack.c.b16 %v512, %v511
        %v523 = vpack.c.b16 %v514, %v513
        %v524 = vpack.c.b16 %v516, %v515
        %533 = vmatprep.subr.bf16.mxu0 0
        %534 = vmatpush1.bf16.msra.mxu0 %v524
        %535 = vmatprep.subr.bf16.mxu0 0
        %536 = vmatpush1.bf16.msra.mxu0 %v523
        %537 = vmatprep.subr.bf16.mxu0 0
        %538 = vmatpush1.bf16.msra.mxu0 %v522
        %539 = vmatprep.subr.bf16.mxu0 0
        %540 = vmatpush1.bf16.msra.mxu0 %v521
        %541 = vmatprep.subr.bf16.mxu0 0
        %542 = vmatpush1.bf16.msra.mxu0 %v520
        %543 = vmatprep.subr.bf16.mxu0 0
        %544 = vmatpush1.bf16.msra.mxu0 %v519
        %545 = vmatprep.subr.bf16.mxu0 0
        %546 = vmatpush1.bf16.msra.mxu0 %v518
        %547 = vmatprep.subr.bf16.mxu0 0
        %548 = vmatpush1.bf16.msra.mxu0 %v517
        %549 = vmatprep.subr.bf16.mxu0 0
        %550 = vmatpush2.bf16.msra.mxu0 0
        %551 = vmatprep.subr.bf16.mxu0 0
        %552 = vmatpush2.bf16.msra.mxu0 0
        %553 = vmatprep.subr.bf16.mxu0 0
        %554 = vmatpush2.bf16.msra.mxu0 0
        %555 = vmatprep.subr.bf16.mxu0 0
        %556 = vmatpush2.bf16.msra.mxu0 0
        %557 = vmatprep.subr.bf16.mxu0 0
        %558 = vmatpush2.bf16.msra.mxu0 0
        %559 = vmatprep.subr.bf16.mxu0 0
        %560 = vmatpush2.bf16.msra.mxu0 0
        %561 = vmatprep.subr.bf16.mxu0 0
        %562 = vmatpush2.bf16.msra.mxu0 0
        %563 = vmatprep.subr.bf16.mxu0 0
        %564 = vmatpush2.bf16.msra.mxu0 0
        %565 = vmatprep.mubr.bf16.mxu0 0
        %566 = vmatmul.mubr.bf16.gmra.mxu0 %v407
        %v567 = vpop.f32.mrf.mxu0
        %v568 = vadd.f32 %v483, %v567
        %v569 = vpop.f32.mrf.mxu0
        %v570 = vpop.f32.mrf.mxu0
        %v571 = vadd.f32 %v483, %v570
        %v572 = vpop.f32.mrf.mxu0
        %573 = vdwg.mxu0
        %v574 = vtanh.pop %v568
        %v575 = vtanh.pop %v571
        %v576 = vpack.c.bf16 %v575, %v574
        %577 = vmatprep.subr.bf16.mxu0 0
        %578 = vmatpush1.bf16.msra.mxu0 %v524
        %579 = vmatprep.subr.bf16.mxu0 0
        %580 = vmatpush1.bf16.msra.mxu0 %v523
        %581 = vmatprep.subr.bf16.mxu0 0
        %582 = vmatpush1.bf16.msra.mxu0 %v522
        %583 = vmatprep.subr.bf16.mxu0 0
        %584 = vmatpush1.bf16.msra.mxu0 %v521
        %585 = vmatprep.subr.bf16.mxu0 0
        %586 = vmatpush1.bf16.msra.mxu0 %v520
        %587 = vmatprep.subr.bf16.mxu0 0
        %588 = vmatpush1.bf16.msra.mxu0 %v519
        %589 = vmatprep.subr.bf16.mxu0 0
        %590 = vmatpush1.bf16.msra.mxu0 %v518
        %591 = vmatprep.subr.bf16.mxu0 0
        %592 = vmatpush1.bf16.msra.mxu0 %v517
        %593 = vmatprep.subr.bf16.mxu0 0
        %594 = vmatpush2.bf16.msra.mxu0 0
        %595 = vmatprep.subr.bf16.mxu0 0
        %596 = vmatpush2.bf16.msra.mxu0 0
        %597 = vmatprep.subr.bf16.mxu0 0
        %598 = vmatpush2.bf16.msra.mxu0 0
        %599 = vmatprep.subr.bf16.mxu0 0
        %600 = vmatpush2.bf16.msra.mxu0 0
        %601 = vmatprep.subr.bf16.mxu0 0
        %602 = vmatpush2.bf16.msra.mxu0 0
        %603 = vmatprep.subr.bf16.mxu0 0
        %604 = vmatpush2.bf16.msra.mxu0 0
        %605 = vmatprep.subr.bf16.mxu0 0
        %606 = vmatpush2.bf16.msra.mxu0 0
        %607 = vmatprep.subr.bf16.mxu0 0
        %608 = vmatpush2.bf16.msra.mxu0 0
        %609 = vmatprep.mubr.bf16.mxu0 0
        %610 = vmatmul.mubr.bf16.gmra.mxu0 %v461
        %v611 = vpop.f32.mrf.mxu0
        %v612 = vadd.f32 %v483, %v611
        %v613 = vpop.f32.mrf.mxu0
        %v614 = vpop.f32.mrf.mxu0
        %v615 = vadd.f32 %v483, %v614
        %v616 = vpop.f32.mrf.mxu0
        %617 = vdwg.mxu0
        %v618 = vtanh.pop %v612
        %v619 = vtanh.pop %v615
        %v620 = vpack.c.bf16 %v619, %v618
        %s621 = scalar_lea.vmem [#allocation2], 64
        %v622 = vld [vmem:[%s621] sm:$0xf]
        %v623 = vld [vmem:[%s621 + $0x4] sm:$0xf]
        %v624 = vld [vmem:[%s621 + $0x8] sm:$0xf]
        %v625 = vld [vmem:[%s621 + $0xc] sm:$0xf]
        %v626 = vld [vmem:[%s621 + $0x10] sm:$0xf]
        %v627 = vld [vmem:[%s621 + $0x14] sm:$0xf]
        %v628 = vld [vmem:[%s621 + $0x18] sm:$0xf]
        %v629 = vld [vmem:[%s621 + $0x1c] sm:$0xf]
        %v630 = vld [vmem:[%s621 + $0x20] sm:$0xf]
        %v631 = vld [vmem:[%s621 + $0x24] sm:$0xf]
        %v632 = vld [vmem:[%s621 + $0x28] sm:$0xf]
        %v633 = vld [vmem:[%s621 + $0x2c] sm:$0xf]
        %v634 = vld [vmem:[%s621 + $0x30] sm:$0xf]
        %v635 = vld [vmem:[%s621 + $0x34] sm:$0xf]
        %v636 = vld [vmem:[%s621 + $0x38] sm:$0xf]
        %v637 = vld [vmem:[%s621 + $0x3c] sm:$0xf]
        %s638 = scalar_lea.vmem %s4, 1
        %v639 = vld [vmem:[%s638] sm:$0x1]
        %v641 = vlaneseq
        %v642 = vshrl.u32 %v641, 7
        %v643 = vsub.s32 0, %v642
        %v644 = vrot.slane %v639, %v643
        %v662 = vunpack.c.l.b16 %v622
        %v663 = vunpack.c.l.b16 %v623
        %v664 = vunpack.c.l.b16 %v624
        %v665 = vunpack.c.l.b16 %v625
        %v666 = vunpack.c.l.b16 %v626
        %v667 = vunpack.c.l.b16 %v627
        %v668 = vunpack.c.l.b16 %v628
        %v669 = vunpack.c.l.b16 %v629
        %v670 = vunpack.c.l.b16 %v630
        %v671 = vunpack.c.l.b16 %v631
        %v672 = vunpack.c.l.b16 %v632
        %v673 = vunpack.c.l.b16 %v633
        %v674 = vunpack.c.l.b16 %v634
        %v675 = vunpack.c.l.b16 %v635
        %v676 = vunpack.c.l.b16 %v636
        %v677 = vunpack.c.l.b16 %v637
        %v678 = vpack.c.b16 %v663, %v662
        %v679 = vpack.c.b16 %v665, %v664
        %v680 = vpack.c.b16 %v667, %v666
        %v681 = vpack.c.b16 %v669, %v668
        %v682 = vpack.c.b16 %v671, %v670
        %v683 = vpack.c.b16 %v673, %v672
        %v684 = vpack.c.b16 %v675, %v674
        %v685 = vpack.c.b16 %v677, %v676
        %694 = vmatprep.subr.bf16.mxu0 0
        %695 = vmatpush1.bf16.msra.mxu0 %v685
        %696 = vmatprep.subr.bf16.mxu0 0
        %697 = vmatpush1.bf16.msra.mxu0 %v684
        %698 = vmatprep.subr.bf16.mxu0 0
        %699 = vmatpush1.bf16.msra.mxu0 %v683
        %700 = vmatprep.subr.bf16.mxu0 0
        %701 = vmatpush1.bf16.msra.mxu0 %v682
        %702 = vmatprep.subr.bf16.mxu0 0
        %703 = vmatpush1.bf16.msra.mxu0 %v681
        %704 = vmatprep.subr.bf16.mxu0 0
        %705 = vmatpush1.bf16.msra.mxu0 %v680
        %706 = vmatprep.subr.bf16.mxu0 0
        %707 = vmatpush1.bf16.msra.mxu0 %v679
        %708 = vmatprep.subr.bf16.mxu0 0
        %709 = vmatpush1.bf16.msra.mxu0 %v678
        %710 = vmatprep.subr.bf16.mxu0 0
        %711 = vmatpush2.bf16.msra.mxu0 0
        %712 = vmatprep.subr.bf16.mxu0 0
        %713 = vmatpush2.bf16.msra.mxu0 0
        %714 = vmatprep.subr.bf16.mxu0 0
        %715 = vmatpush2.bf16.msra.mxu0 0
        %716 = vmatprep.subr.bf16.mxu0 0
        %717 = vmatpush2.bf16.msra.mxu0 0
        %718 = vmatprep.subr.bf16.mxu0 0
        %719 = vmatpush2.bf16.msra.mxu0 0
        %720 = vmatprep.subr.bf16.mxu0 0
        %721 = vmatpush2.bf16.msra.mxu0 0
        %722 = vmatprep.subr.bf16.mxu0 0
        %723 = vmatpush2.bf16.msra.mxu0 0
        %724 = vmatprep.subr.bf16.mxu0 0
        %725 = vmatpush2.bf16.msra.mxu0 0
        %726 = vmatprep.mubr.bf16.mxu0 0
        %727 = vmatmul.mubr.bf16.gmra.mxu0 %v576
        %v728 = vpop.f32.mrf.mxu0
        %v729 = vadd.f32 %v644, %v728
        %v730 = vpop.f32.mrf.mxu0
        %v731 = vpop.f32.mrf.mxu0
        %v732 = vadd.f32 %v644, %v731
        %v733 = vpop.f32.mrf.mxu0
        %734 = vdwg.mxu0
        %v735 = vtanh.pop %v729
        %v736 = vtanh.pop %v732
        %v737 = vpack.c.bf16 %v736, %v735
        %738 = vmatprep.subr.bf16.mxu0 0
        %739 = vmatpush1.bf16.msra.mxu0 %v685
        %740 = vmatprep.subr.bf16.mxu0 0
        %741 = vmatpush1.bf16.msra.mxu0 %v684
        %742 = vmatprep.subr.bf16.mxu0 0
        %743 = vmatpush1.bf16.msra.mxu0 %v683
        %744 = vmatprep.subr.bf16.mxu0 0
        %745 = vmatpush1.bf16.msra.mxu0 %v682
        %746 = vmatprep.subr.bf16.mxu0 0
        %747 = vmatpush1.bf16.msra.mxu0 %v681
        %748 = vmatprep.subr.bf16.mxu0 0
        %749 = vmatpush1.bf16.msra.mxu0 %v680
        %750 = vmatprep.subr.bf16.mxu0 0
        %751 = vmatpush1.bf16.msra.mxu0 %v679
        %752 = vmatprep.subr.bf16.mxu0 0
        %753 = vmatpush1.bf16.msra.mxu0 %v678
        %754 = vmatprep.subr.bf16.mxu0 0
        %755 = vmatpush2.bf16.msra.mxu0 0
        %756 = vmatprep.subr.bf16.mxu0 0
        %757 = vmatpush2.bf16.msra.mxu0 0
        %758 = vmatprep.subr.bf16.mxu0 0
        %759 = vmatpush2.bf16.msra.mxu0 0
        %760 = vmatprep.subr.bf16.mxu0 0
        %761 = vmatpush2.bf16.msra.mxu0 0
        %762 = vmatprep.subr.bf16.mxu0 0
        %763 = vmatpush2.bf16.msra.mxu0 0
        %764 = vmatprep.subr.bf16.mxu0 0
        %765 = vmatpush2.bf16.msra.mxu0 0
        %766 = vmatprep.subr.bf16.mxu0 0
        %767 = vmatpush2.bf16.msra.mxu0 0
        %768 = vmatprep.subr.bf16.mxu0 0
        %769 = vmatpush2.bf16.msra.mxu0 0
        %770 = vmatprep.mubr.bf16.mxu0 0
        %771 = vmatmul.mubr.bf16.gmra.mxu0 %v620
        %v772 = vpop.f32.mrf.mxu0
        %v773 = vadd.f32 %v644, %v772
        %v774 = vpop.f32.mrf.mxu0
        %v775 = vpop.f32.mrf.mxu0
        %v776 = vadd.f32 %v644, %v775
        %v777 = vpop.f32.mrf.mxu0
        %778 = vdwg.mxu0
        %v779 = vtanh.pop %v773
        %v780 = vtanh.pop %v776
        %v781 = vpack.c.bf16 %v780, %v779
        %s782 = scalar_lea.vmem [#allocation2], 128
        %v783 = vld [vmem:[%s782] sm:$0xf]
        %v784 = vld [vmem:[%s782 + $0x4] sm:$0xf]
        %v785 = vld [vmem:[%s782 + $0x8] sm:$0xf]
        %v786 = vld [vmem:[%s782 + $0xc] sm:$0xf]
        %v787 = vld [vmem:[%s782 + $0x10] sm:$0xf]
        %v788 = vld [vmem:[%s782 + $0x14] sm:$0xf]
        %v789 = vld [vmem:[%s782 + $0x18] sm:$0xf]
        %v790 = vld [vmem:[%s782 + $0x1c] sm:$0xf]
        %v791 = vld [vmem:[%s782 + $0x20] sm:$0xf]
        %v792 = vld [vmem:[%s782 + $0x24] sm:$0xf]
        %v793 = vld [vmem:[%s782 + $0x28] sm:$0xf]
        %v794 = vld [vmem:[%s782 + $0x2c] sm:$0xf]
        %v795 = vld [vmem:[%s782 + $0x30] sm:$0xf]
        %v796 = vld [vmem:[%s782 + $0x34] sm:$0xf]
        %v797 = vld [vmem:[%s782 + $0x38] sm:$0xf]
        %v798 = vld [vmem:[%s782 + $0x3c] sm:$0xf]
        %s799 = scalar_lea.vmem %s4, 2
        %v800 = vld [vmem:[%s799] sm:$0x1]
        %v802 = vlaneseq
        %v803 = vshrl.u32 %v802, 7
        %v804 = vsub.s32 0, %v803
        %v805 = vrot.slane %v800, %v804
        %v823 = vunpack.c.l.b16 %v783
        %v824 = vunpack.c.l.b16 %v784
        %v825 = vunpack.c.l.b16 %v785
        %v826 = vunpack.c.l.b16 %v786
        %v827 = vunpack.c.l.b16 %v787
        %v828 = vunpack.c.l.b16 %v788
        %v829 = vunpack.c.l.b16 %v789
        %v830 = vunpack.c.l.b16 %v790
        %v831 = vunpack.c.l.b16 %v791
        %v832 = vunpack.c.l.b16 %v792
        %v833 = vunpack.c.l.b16 %v793
        %v834 = vunpack.c.l.b16 %v794
        %v835 = vunpack.c.l.b16 %v795
        %v836 = vunpack.c.l.b16 %v796
        %v837 = vunpack.c.l.b16 %v797
        %v838 = vunpack.c.l.b16 %v798
        %v839 = vpack.c.b16 %v824, %v823
        %v840 = vpack.c.b16 %v826, %v825
        %v841 = vpack.c.b16 %v828, %v827
        %v842 = vpack.c.b16 %v830, %v829
        %v843 = vpack.c.b16 %v832, %v831
        %v844 = vpack.c.b16 %v834, %v833
        %v845 = vpack.c.b16 %v836, %v835
        %v846 = vpack.c.b16 %v838, %v837
        %855 = vmatprep.subr.bf16.mxu0 0
        %856 = vmatpush1.bf16.msra.mxu0 %v846
        %857 = vmatprep.subr.bf16.mxu0 0
        %858 = vmatpush1.bf16.msra.mxu0 %v845
        %859 = vmatprep.subr.bf16.mxu0 0
        %860 = vmatpush1.bf16.msra.mxu0 %v844
        %861 = vmatprep.subr.bf16.mxu0 0
        %862 = vmatpush1.bf16.msra.mxu0 %v843
        %863 = vmatprep.subr.bf16.mxu0 0
        %864 = vmatpush1.bf16.msra.mxu0 %v842
        %865 = vmatprep.subr.bf16.mxu0 0
        %866 = vmatpush1.bf16.msra.mxu0 %v841
        %867 = vmatprep.subr.bf16.mxu0 0
        %868 = vmatpush1.bf16.msra.mxu0 %v840
        %869 = vmatprep.subr.bf16.mxu0 0
        %870 = vmatpush1.bf16.msra.mxu0 %v839
        %871 = vmatprep.subr.bf16.mxu0 0
        %872 = vmatpush2.bf16.msra.mxu0 0
        %873 = vmatprep.subr.bf16.mxu0 0
        %874 = vmatpush2.bf16.msra.mxu0 0
        %875 = vmatprep.subr.bf16.mxu0 0
        %876 = vmatpush2.bf16.msra.mxu0 0
        %877 = vmatprep.subr.bf16.mxu0 0
        %878 = vmatpush2.bf16.msra.mxu0 0
        %879 = vmatprep.subr.bf16.mxu0 0
        %880 = vmatpush2.bf16.msra.mxu0 0
        %881 = vmatprep.subr.bf16.mxu0 0
        %882 = vmatpush2.bf16.msra.mxu0 0
        %883 = vmatprep.subr.bf16.mxu0 0
        %884 = vmatpush2.bf16.msra.mxu0 0
        %885 = vmatprep.subr.bf16.mxu0 0
        %886 = vmatpush2.bf16.msra.mxu0 0
        %887 = vmatprep.mubr.bf16.mxu0 0
        %888 = vmatmul.mubr.bf16.gmra.mxu0 %v737
        %v889 = vpop.f32.mrf.mxu0
        %v890 = vadd.f32 %v805, %v889
        %v891 = vpop.f32.mrf.mxu0
        %v892 = vpop.f32.mrf.mxu0
        %v893 = vadd.f32 %v805, %v892
        %v894 = vpop.f32.mrf.mxu0
        %895 = vdwg.mxu0
        %v896 = vtanh.pop %v890
        %v897 = vtanh.pop %v893
        %v898 = vpack.c.bf16 %v897, %v896
        %899 = vmatprep.subr.bf16.mxu0 0
        %900 = vmatpush1.bf16.msra.mxu0 %v846
        %901 = vmatprep.subr.bf16.mxu0 0
        %902 = vmatpush1.bf16.msra.mxu0 %v845
        %903 = vmatprep.subr.bf16.mxu0 0
        %904 = vmatpush1.bf16.msra.mxu0 %v844
        %905 = vmatprep.subr.bf16.mxu0 0
        %906 = vmatpush1.bf16.msra.mxu0 %v843
        %907 = vmatprep.subr.bf16.mxu0 0
        %908 = vmatpush1.bf16.msra.mxu0 %v842
        %909 = vmatprep.subr.bf16.mxu0 0
        %910 = vmatpush1.bf16.msra.mxu0 %v841
        %911 = vmatprep.subr.bf16.mxu0 0
        %912 = vmatpush1.bf16.msra.mxu0 %v840
        %913 = vmatprep.subr.bf16.mxu0 0
        %914 = vmatpush1.bf16.msra.mxu0 %v839
        %915 = vmatprep.subr.bf16.mxu0 0
        %916 = vmatpush2.bf16.msra.mxu0 0
        %917 = vmatprep.subr.bf16.mxu0 0
        %918 = vmatpush2.bf16.msra.mxu0 0
        %919 = vmatprep.subr.bf16.mxu0 0
        %920 = vmatpush2.bf16.msra.mxu0 0
        %921 = vmatprep.subr.bf16.mxu0 0
        %922 = vmatpush2.bf16.msra.mxu0 0
        %923 = vmatprep.subr.bf16.mxu0 0
        %924 = vmatpush2.bf16.msra.mxu0 0
        %925 = vmatprep.subr.bf16.mxu0 0
        %926 = vmatpush2.bf16.msra.mxu0 0
        %927 = vmatprep.subr.bf16.mxu0 0
        %928 = vmatpush2.bf16.msra.mxu0 0
        %929 = vmatprep.subr.bf16.mxu0 0
        %930 = vmatpush2.bf16.msra.mxu0 0
        %931 = vmatprep.mubr.bf16.mxu0 0
        %932 = vmatmul.mubr.bf16.gmra.mxu0 %v781
        %v933 = vpop.f32.mrf.mxu0
        %v934 = vadd.f32 %v805, %v933
        %v935 = vpop.f32.mrf.mxu0
        %v936 = vpop.f32.mrf.mxu0
        %v937 = vadd.f32 %v805, %v936
        %v938 = vpop.f32.mrf.mxu0
        %939 = vdwg.mxu0
        %v940 = vtanh.pop %v934
        %v941 = vtanh.pop %v937
        %v942 = vpack.c.bf16 %v941, %v940
        %s943 = scalar_lea.vmem [#allocation2], 192
        %v944 = vld [vmem:[%s943] sm:$0xf]
        %v945 = vld [vmem:[%s943 + $0x4] sm:$0xf]
        %v946 = vld [vmem:[%s943 + $0x8] sm:$0xf]
        %v947 = vld [vmem:[%s943 + $0xc] sm:$0xf]
        %v948 = vld [vmem:[%s943 + $0x10] sm:$0xf]
        %v949 = vld [vmem:[%s943 + $0x14] sm:$0xf]
        %v950 = vld [vmem:[%s943 + $0x18] sm:$0xf]
        %v951 = vld [vmem:[%s943 + $0x1c] sm:$0xf]
        %v952 = vld [vmem:[%s943 + $0x20] sm:$0xf]
        %v953 = vld [vmem:[%s943 + $0x24] sm:$0xf]
        %v954 = vld [vmem:[%s943 + $0x28] sm:$0xf]
        %v955 = vld [vmem:[%s943 + $0x2c] sm:$0xf]
        %v956 = vld [vmem:[%s943 + $0x30] sm:$0xf]
        %v957 = vld [vmem:[%s943 + $0x34] sm:$0xf]
        %v958 = vld [vmem:[%s943 + $0x38] sm:$0xf]
        %v959 = vld [vmem:[%s943 + $0x3c] sm:$0xf]
        %s960 = scalar_lea.vmem %s4, 3
        %v961 = vld [vmem:[%s960] sm:$0x1]
        %v963 = vlaneseq
        %v964 = vshrl.u32 %v963, 7
        %v965 = vsub.s32 0, %v964
        %v966 = vrot.slane %v961, %v965
        %v984 = vunpack.c.l.b16 %v944
        %v985 = vunpack.c.l.b16 %v945
        %v986 = vunpack.c.l.b16 %v946
        %v987 = vunpack.c.l.b16 %v947
        %v988 = vunpack.c.l.b16 %v948
        %v989 = vunpack.c.l.b16 %v949
        %v990 = vunpack.c.l.b16 %v950
        %v991 = vunpack.c.l.b16 %v951
        %v992 = vunpack.c.l.b16 %v952
        %v993 = vunpack.c.l.b16 %v953
        %v994 = vunpack.c.l.b16 %v954
        %v995 = vunpack.c.l.b16 %v955
        %v996 = vunpack.c.l.b16 %v956
        %v997 = vunpack.c.l.b16 %v957
        %v998 = vunpack.c.l.b16 %v958
        %v999 = vunpack.c.l.b16 %v959
        %v1000 = vpack.c.b16 %v985, %v984
        %v1001 = vpack.c.b16 %v987, %v986
        %v1002 = vpack.c.b16 %v989, %v988
        %v1003 = vpack.c.b16 %v991, %v990
        %v1004 = vpack.c.b16 %v993, %v992
        %v1005 = vpack.c.b16 %v995, %v994
        %v1006 = vpack.c.b16 %v997, %v996
        %v1007 = vpack.c.b16 %v999, %v998
        %1016 = vmatprep.subr.bf16.mxu0 0
        %1017 = vmatpush1.bf16.msra.mxu0 %v1007
        %1018 = vmatprep.subr.bf16.mxu0 0
        %1019 = vmatpush1.bf16.msra.mxu0 %v1006
        %1020 = vmatprep.subr.bf16.mxu0 0
        %1021 = vmatpush1.bf16.msra.mxu0 %v1005
        %1022 = vmatprep.subr.bf16.mxu0 0
        %1023 = vmatpush1.bf16.msra.mxu0 %v1004
        %1024 = vmatprep.subr.bf16.mxu0 0
        %1025 = vmatpush1.bf16.msra.mxu0 %v1003
        %1026 = vmatprep.subr.bf16.mxu0 0
        %1027 = vmatpush1.bf16.msra.mxu0 %v1002
        %1028 = vmatprep.subr.bf16.mxu0 0
        %1029 = vmatpush1.bf16.msra.mxu0 %v1001
        %1030 = vmatprep.subr.bf16.mxu0 0
        %1031 = vmatpush1.bf16.msra.mxu0 %v1000
        %1032 = vmatprep.subr.bf16.mxu0 0
        %1033 = vmatpush2.bf16.msra.mxu0 0
        %1034 = vmatprep.subr.bf16.mxu0 0
        %1035 = vmatpush2.bf16.msra.mxu0 0
        %1036 = vmatprep.subr.bf16.mxu0 0
        %1037 = vmatpush2.bf16.msra.mxu0 0
        %1038 = vmatprep.subr.bf16.mxu0 0
        %1039 = vmatpush2.bf16.msra.mxu0 0
        %1040 = vmatprep.subr.bf16.mxu0 0
        %1041 = vmatpush2.bf16.msra.mxu0 0
        %1042 = vmatprep.subr.bf16.mxu0 0
        %1043 = vmatpush2.bf16.msra.mxu0 0
        %1044 = vmatprep.subr.bf16.mxu0 0
        %1045 = vmatpush2.bf16.msra.mxu0 0
        %1046 = vmatprep.subr.bf16.mxu0 0
        %1047 = vmatpush2.bf16.msra.mxu0 0
        %1048 = vmatprep.mubr.bf16.mxu0 0
        %1049 = vmatmul.mubr.bf16.gmra.mxu0 %v898
        %v1050 = vpop.f32.mrf.mxu0
        %v1051 = vadd.f32 %v966, %v1050
        %v1052 = vpop.f32.mrf.mxu0
        %v1053 = vpop.f32.mrf.mxu0
        %v1054 = vadd.f32 %v966, %v1053
        %v1055 = vpop.f32.mrf.mxu0
        %1056 = vdwg.mxu0
        %v1057 = vtanh.pop %v1051
        %v1058 = vtanh.pop %v1054
        %v1059 = vpack.c.bf16 %v1058, %v1057
        %1060 = vmatprep.subr.bf16.mxu0 0
        %1061 = vmatpush1.bf16.msra.mxu0 %v1007
        %1062 = vmatprep.subr.bf16.mxu0 0
        %1063 = vmatpush1.bf16.msra.mxu0 %v1006
        %1064 = vmatprep.subr.bf16.mxu0 0
        %1065 = vmatpush1.bf16.msra.mxu0 %v1005
        %1066 = vmatprep.subr.bf16.mxu0 0
        %1067 = vmatpush1.bf16.msra.mxu0 %v1004
        %1068 = vmatprep.subr.bf16.mxu0 0
        %1069 = vmatpush1.bf16.msra.mxu0 %v1003
        %1070 = vmatprep.subr.bf16.mxu0 0
        %1071 = vmatpush1.bf16.msra.mxu0 %v1002
        %1072 = vmatprep.subr.bf16.mxu0 0
        %1073 = vmatpush1.bf16.msra.mxu0 %v1001
        %1074 = vmatprep.subr.bf16.mxu0 0
        %1075 = vmatpush1.bf16.msra.mxu0 %v1000
        %1076 = vmatprep.subr.bf16.mxu0 0
        %1077 = vmatpush2.bf16.msra.mxu0 0
        %1078 = vmatprep.subr.bf16.mxu0 0
        %1079 = vmatpush2.bf16.msra.mxu0 0
        %1080 = vmatprep.subr.bf16.mxu0 0
        %1081 = vmatpush2.bf16.msra.mxu0 0
        %1082 = vmatprep.subr.bf16.mxu0 0
        %1083 = vmatpush2.bf16.msra.mxu0 0
        %1084 = vmatprep.subr.bf16.mxu0 0
        %1085 = vmatpush2.bf16.msra.mxu0 0
        %1086 = vmatprep.subr.bf16.mxu0 0
        %1087 = vmatpush2.bf16.msra.mxu0 0
        %1088 = vmatprep.subr.bf16.mxu0 0
        %1089 = vmatpush2.bf16.msra.mxu0 0
        %1090 = vmatprep.subr.bf16.mxu0 0
        %1091 = vmatpush2.bf16.msra.mxu0 0
        %1092 = vmatprep.mubr.bf16.mxu0 0
        %1093 = vmatmul.mubr.bf16.gmra.mxu0 %v942
        %v1094 = vpop.f32.mrf.mxu0
        %v1095 = vadd.f32 %v966, %v1094
        %v1096 = vpop.f32.mrf.mxu0
        %v1097 = vpop.f32.mrf.mxu0
        %v1098 = vadd.f32 %v966, %v1097
        %v1099 = vpop.f32.mrf.mxu0
        %1100 = vdwg.mxu0
        %v1101 = vtanh.pop %v1095
        %v1102 = vtanh.pop %v1098
        %v1103 = vpack.c.bf16 %v1102, %v1101
        %s1104 = scalar_lea.vmem [#allocation2], 256
        %v1105 = vld [vmem:[%s1104] sm:$0xf]
        %v1106 = vld [vmem:[%s1104 + $0x4] sm:$0xf]
        %v1107 = vld [vmem:[%s1104 + $0x8] sm:$0xf]
        %v1108 = vld [vmem:[%s1104 + $0xc] sm:$0xf]
        %v1109 = vld [vmem:[%s1104 + $0x10] sm:$0xf]
        %v1110 = vld [vmem:[%s1104 + $0x14] sm:$0xf]
        %v1111 = vld [vmem:[%s1104 + $0x18] sm:$0xf]
        %v1112 = vld [vmem:[%s1104 + $0x1c] sm:$0xf]
        %v1113 = vld [vmem:[%s1104 + $0x20] sm:$0xf]
        %v1114 = vld [vmem:[%s1104 + $0x24] sm:$0xf]
        %v1115 = vld [vmem:[%s1104 + $0x28] sm:$0xf]
        %v1116 = vld [vmem:[%s1104 + $0x2c] sm:$0xf]
        %v1117 = vld [vmem:[%s1104 + $0x30] sm:$0xf]
        %v1118 = vld [vmem:[%s1104 + $0x34] sm:$0xf]
        %v1119 = vld [vmem:[%s1104 + $0x38] sm:$0xf]
        %v1120 = vld [vmem:[%s1104 + $0x3c] sm:$0xf]
        %s1121 = scalar_lea.vmem %s4, 4
        %v1122 = vld [vmem:[%s1121] sm:$0x1]
        %v1124 = vlaneseq
        %v1125 = vshrl.u32 %v1124, 7
        %v1126 = vsub.s32 0, %v1125
        %v1127 = vrot.slane %v1122, %v1126
        %v1145 = vunpack.c.l.b16 %v1105
        %v1146 = vunpack.c.l.b16 %v1106
        %v1147 = vunpack.c.l.b16 %v1107
        %v1148 = vunpack.c.l.b16 %v1108
        %v1149 = vunpack.c.l.b16 %v1109
        %v1150 = vunpack.c.l.b16 %v1110
        %v1151 = vunpack.c.l.b16 %v1111
        %v1152 = vunpack.c.l.b16 %v1112
        %v1153 = vunpack.c.l.b16 %v1113
        %v1154 = vunpack.c.l.b16 %v1114
        %v1155 = vunpack.c.l.b16 %v1115
        %v1156 = vunpack.c.l.b16 %v1116
        %v1157 = vunpack.c.l.b16 %v1117
        %v1158 = vunpack.c.l.b16 %v1118
        %v1159 = vunpack.c.l.b16 %v1119
        %v1160 = vunpack.c.l.b16 %v1120
        %v1161 = vpack.c.b16 %v1146, %v1145
        %v1162 = vpack.c.b16 %v1148, %v1147
        %v1163 = vpack.c.b16 %v1150, %v1149
        %v1164 = vpack.c.b16 %v1152, %v1151
        %v1165 = vpack.c.b16 %v1154, %v1153
        %v1166 = vpack.c.b16 %v1156, %v1155
        %v1167 = vpack.c.b16 %v1158, %v1157
        %v1168 = vpack.c.b16 %v1160, %v1159
        %1177 = vmatprep.subr.bf16.mxu0 0
        %1178 = vmatpush1.bf16.msra.mxu0 %v1168
        %1179 = vmatprep.subr.bf16.mxu0 0
        %1180 = vmatpush1.bf16.msra.mxu0 %v1167
        %1181 = vmatprep.subr.bf16.mxu0 0
        %1182 = vmatpush1.bf16.msra.mxu0 %v1166
        %1183 = vmatprep.subr.bf16.mxu0 0
        %1184 = vmatpush1.bf16.msra.mxu0 %v1165
        %1185 = vmatprep.subr.bf16.mxu0 0
        %1186 = vmatpush1.bf16.msra.mxu0 %v1164
        %1187 = vmatprep.subr.bf16.mxu0 0
        %1188 = vmatpush1.bf16.msra.mxu0 %v1163
        %1189 = vmatprep.subr.bf16.mxu0 0
        %1190 = vmatpush1.bf16.msra.mxu0 %v1162
        %1191 = vmatprep.subr.bf16.mxu0 0
        %1192 = vmatpush1.bf16.msra.mxu0 %v1161
        %1193 = vmatprep.subr.bf16.mxu0 0
        %1194 = vmatpush2.bf16.msra.mxu0 0
        %1195 = vmatprep.subr.bf16.mxu0 0
        %1196 = vmatpush2.bf16.msra.mxu0 0
        %1197 = vmatprep.subr.bf16.mxu0 0
        %1198 = vmatpush2.bf16.msra.mxu0 0
        %1199 = vmatprep.subr.bf16.mxu0 0
        %1200 = vmatpush2.bf16.msra.mxu0 0
        %1201 = vmatprep.subr.bf16.mxu0 0
        %1202 = vmatpush2.bf16.msra.mxu0 0
        %1203 = vmatprep.subr.bf16.mxu0 0
        %1204 = vmatpush2.bf16.msra.mxu0 0
        %1205 = vmatprep.subr.bf16.mxu0 0
        %1206 = vmatpush2.bf16.msra.mxu0 0
        %1207 = vmatprep.subr.bf16.mxu0 0
        %1208 = vmatpush2.bf16.msra.mxu0 0
        %1209 = vmatprep.mubr.bf16.mxu0 0
        %1210 = vmatmul.mubr.bf16.gmra.mxu0 %v1059
        %v1211 = vpop.f32.mrf.mxu0
        %v1212 = vadd.f32 %v1127, %v1211
        %v1213 = vpop.f32.mrf.mxu0
        %v1214 = vpop.f32.mrf.mxu0
        %v1215 = vadd.f32 %v1127, %v1214
        %v1216 = vpop.f32.mrf.mxu0
        %1217 = vdwg.mxu0
        %v1218 = vtanh.pop %v1212
        %v1219 = vtanh.pop %v1215
        %v1220 = vpack.c.bf16 %v1219, %v1218
        %1221 = vmatprep.subr.bf16.mxu0 0
        %1222 = vmatpush1.bf16.msra.mxu0 %v1168
        %1223 = vmatprep.subr.bf16.mxu0 0
        %1224 = vmatpush1.bf16.msra.mxu0 %v1167
        %1225 = vmatprep.subr.bf16.mxu0 0
        %1226 = vmatpush1.bf16.msra.mxu0 %v1166
        %1227 = vmatprep.subr.bf16.mxu0 0
        %1228 = vmatpush1.bf16.msra.mxu0 %v1165
        %1229 = vmatprep.subr.bf16.mxu0 0
        %1230 = vmatpush1.bf16.msra.mxu0 %v1164
        %1231 = vmatprep.subr.bf16.mxu0 0
        %1232 = vmatpush1.bf16.msra.mxu0 %v1163
        %1233 = vmatprep.subr.bf16.mxu0 0
        %1234 = vmatpush1.bf16.msra.mxu0 %v1162
        %1235 = vmatprep.subr.bf16.mxu0 0
        %1236 = vmatpush1.bf16.msra.mxu0 %v1161
        %1237 = vmatprep.subr.bf16.mxu0 0
        %1238 = vmatpush2.bf16.msra.mxu0 0
        %1239 = vmatprep.subr.bf16.mxu0 0
        %1240 = vmatpush2.bf16.msra.mxu0 0
        %1241 = vmatprep.subr.bf16.mxu0 0
        %1242 = vmatpush2.bf16.msra.mxu0 0
        %1243 = vmatprep.subr.bf16.mxu0 0
        %1244 = vmatpush2.bf16.msra.mxu0 0
        %1245 = vmatprep.subr.bf16.mxu0 0
        %1246 = vmatpush2.bf16.msra.mxu0 0
        %1247 = vmatprep.subr.bf16.mxu0 0
        %1248 = vmatpush2.bf16.msra.mxu0 0
        %1249 = vmatprep.subr.bf16.mxu0 0
        %1250 = vmatpush2.bf16.msra.mxu0 0
        %1251 = vmatprep.subr.bf16.mxu0 0
        %1252 = vmatpush2.bf16.msra.mxu0 0
        %1253 = vmatprep.mubr.bf16.mxu0 0
        %1254 = vmatmul.mubr.bf16.gmra.mxu0 %v1103
        %v1255 = vpop.f32.mrf.mxu0
        %v1256 = vadd.f32 %v1127, %v1255
        %v1257 = vpop.f32.mrf.mxu0
        %v1258 = vpop.f32.mrf.mxu0
        %v1259 = vadd.f32 %v1127, %v1258
        %v1260 = vpop.f32.mrf.mxu0
        %1261 = vdwg.mxu0
        %v1262 = vtanh.pop %v1256
        %v1263 = vtanh.pop %v1259
        %v1264 = vpack.c.bf16 %v1263, %v1262
        %s1265 = scalar_lea.vmem [#allocation2], 320
        %v1266 = vld [vmem:[%s1265] sm:$0xf]
        %v1267 = vld [vmem:[%s1265 + $0x4] sm:$0xf]
        %v1268 = vld [vmem:[%s1265 + $0x8] sm:$0xf]
        %v1269 = vld [vmem:[%s1265 + $0xc] sm:$0xf]
        %v1270 = vld [vmem:[%s1265 + $0x10] sm:$0xf]
        %v1271 = vld [vmem:[%s1265 + $0x14] sm:$0xf]
        %v1272 = vld [vmem:[%s1265 + $0x18] sm:$0xf]
        %v1273 = vld [vmem:[%s1265 + $0x1c] sm:$0xf]
        %v1274 = vld [vmem:[%s1265 + $0x20] sm:$0xf]
        %v1275 = vld [vmem:[%s1265 + $0x24] sm:$0xf]
        %v1276 = vld [vmem:[%s1265 + $0x28] sm:$0xf]
        %v1277 = vld [vmem:[%s1265 + $0x2c] sm:$0xf]
        %v1278 = vld [vmem:[%s1265 + $0x30] sm:$0xf]
        %v1279 = vld [vmem:[%s1265 + $0x34] sm:$0xf]
        %v1280 = vld [vmem:[%s1265 + $0x38] sm:$0xf]
        %v1281 = vld [vmem:[%s1265 + $0x3c] sm:$0xf]
        %s1282 = scalar_lea.vmem %s4, 5
        %v1283 = vld [vmem:[%s1282] sm:$0x1]
        %v1285 = vlaneseq
        %v1286 = vshrl.u32 %v1285, 7
        %v1287 = vsub.s32 0, %v1286
        %v1288 = vrot.slane %v1283, %v1287
        %v1306 = vunpack.c.l.b16 %v1266
        %v1307 = vunpack.c.l.b16 %v1267
        %v1308 = vunpack.c.l.b16 %v1268
        %v1309 = vunpack.c.l.b16 %v1269
        %v1310 = vunpack.c.l.b16 %v1270
        %v1311 = vunpack.c.l.b16 %v1271
        %v1312 = vunpack.c.l.b16 %v1272
        %v1313 = vunpack.c.l.b16 %v1273
        %v1314 = vunpack.c.l.b16 %v1274
        %v1315 = vunpack.c.l.b16 %v1275
        %v1316 = vunpack.c.l.b16 %v1276
        %v1317 = vunpack.c.l.b16 %v1277
        %v1318 = vunpack.c.l.b16 %v1278
        %v1319 = vunpack.c.l.b16 %v1279
        %v1320 = vunpack.c.l.b16 %v1280
        %v1321 = vunpack.c.l.b16 %v1281
        %v1322 = vpack.c.b16 %v1307, %v1306
        %v1323 = vpack.c.b16 %v1309, %v1308
        %v1324 = vpack.c.b16 %v1311, %v1310
        %v1325 = vpack.c.b16 %v1313, %v1312
        %v1326 = vpack.c.b16 %v1315, %v1314
        %v1327 = vpack.c.b16 %v1317, %v1316
        %v1328 = vpack.c.b16 %v1319, %v1318
        %v1329 = vpack.c.b16 %v1321, %v1320
        %1338 = vmatprep.subr.bf16.mxu0 0
        %1339 = vmatpush1.bf16.msra.mxu0 %v1329
        %1340 = vmatprep.subr.bf16.mxu0 0
        %1341 = vmatpush1.bf16.msra.mxu0 %v1328
        %1342 = vmatprep.subr.bf16.mxu0 0
        %1343 = vmatpush1.bf16.msra.mxu0 %v1327
        %1344 = vmatprep.subr.bf16.mxu0 0
        %1345 = vmatpush1.bf16.msra.mxu0 %v1326
        %1346 = vmatprep.subr.bf16.mxu0 0
        %1347 = vmatpush1.bf16.msra.mxu0 %v1325
        %1348 = vmatprep.subr.bf16.mxu0 0
        %1349 = vmatpush1.bf16.msra.mxu0 %v1324
        %1350 = vmatprep.subr.bf16.mxu0 0
        %1351 = vmatpush1.bf16.msra.mxu0 %v1323
        %1352 = vmatprep.subr.bf16.mxu0 0
        %1353 = vmatpush1.bf16.msra.mxu0 %v1322
        %1354 = vmatprep.subr.bf16.mxu0 0
        %1355 = vmatpush2.bf16.msra.mxu0 0
        %1356 = vmatprep.subr.bf16.mxu0 0
        %1357 = vmatpush2.bf16.msra.mxu0 0
        %1358 = vmatprep.subr.bf16.mxu0 0
        %1359 = vmatpush2.bf16.msra.mxu0 0
        %1360 = vmatprep.subr.bf16.mxu0 0
        %1361 = vmatpush2.bf16.msra.mxu0 0
        %1362 = vmatprep.subr.bf16.mxu0 0
        %1363 = vmatpush2.bf16.msra.mxu0 0
        %1364 = vmatprep.subr.bf16.mxu0 0
        %1365 = vmatpush2.bf16.msra.mxu0 0
        %1366 = vmatprep.subr.bf16.mxu0 0
        %1367 = vmatpush2.bf16.msra.mxu0 0
        %1368 = vmatprep.subr.bf16.mxu0 0
        %1369 = vmatpush2.bf16.msra.mxu0 0
        %1370 = vmatprep.mubr.bf16.mxu0 0
        %1371 = vmatmul.mubr.bf16.gmra.mxu0 %v1220
        %v1372 = vpop.f32.mrf.mxu0
        %v1373 = vadd.f32 %v1288, %v1372
        %v1374 = vpop.f32.mrf.mxu0
        %v1375 = vpop.f32.mrf.mxu0
        %v1376 = vadd.f32 %v1288, %v1375
        %v1377 = vpop.f32.mrf.mxu0
        %1378 = vdwg.mxu0
        %v1379 = vtanh.pop %v1373
        %v1380 = vtanh.pop %v1376
        %v1381 = vpack.c.bf16 %v1380, %v1379
        %1382 = vmatprep.subr.bf16.mxu0 0
        %1383 = vmatpush1.bf16.msra.mxu0 %v1329
        %1384 = vmatprep.subr.bf16.mxu0 0
        %1385 = vmatpush1.bf16.msra.mxu0 %v1328
        %1386 = vmatprep.subr.bf16.mxu0 0
        %1387 = vmatpush1.bf16.msra.mxu0 %v1327
        %1388 = vmatprep.subr.bf16.mxu0 0
        %1389 = vmatpush1.bf16.msra.mxu0 %v1326
        %1390 = vmatprep.subr.bf16.mxu0 0
        %1391 = vmatpush1.bf16.msra.mxu0 %v1325
        %1392 = vmatprep.subr.bf16.mxu0 0
        %1393 = vmatpush1.bf16.msra.mxu0 %v1324
        %1394 = vmatprep.subr.bf16.mxu0 0
        %1395 = vmatpush1.bf16.msra.mxu0 %v1323
        %1396 = vmatprep.subr.bf16.mxu0 0
        %1397 = vmatpush1.bf16.msra.mxu0 %v1322
        %1398 = vmatprep.subr.bf16.mxu0 0
        %1399 = vmatpush2.bf16.msra.mxu0 0
        %1400 = vmatprep.subr.bf16.mxu0 0
        %1401 = vmatpush2.bf16.msra.mxu0 0
        %1402 = vmatprep.subr.bf16.mxu0 0
        %1403 = vmatpush2.bf16.msra.mxu0 0
        %1404 = vmatprep.subr.bf16.mxu0 0
        %1405 = vmatpush2.bf16.msra.mxu0 0
        %1406 = vmatprep.subr.bf16.mxu0 0
        %1407 = vmatpush2.bf16.msra.mxu0 0
        %1408 = vmatprep.subr.bf16.mxu0 0
        %1409 = vmatpush2.bf16.msra.mxu0 0
        %1410 = vmatprep.subr.bf16.mxu0 0
        %1411 = vmatpush2.bf16.msra.mxu0 0
        %1412 = vmatprep.subr.bf16.mxu0 0
        %1413 = vmatpush2.bf16.msra.mxu0 0
        %1414 = vmatprep.mubr.bf16.mxu0 0
        %1415 = vmatmul.mubr.bf16.gmra.mxu0 %v1264
        %v1416 = vpop.f32.mrf.mxu0
        %v1417 = vadd.f32 %v1288, %v1416
        %v1418 = vpop.f32.mrf.mxu0
        %v1419 = vpop.f32.mrf.mxu0
        %v1420 = vadd.f32 %v1288, %v1419
        %v1421 = vpop.f32.mrf.mxu0
        %1422 = vdwg.mxu0
        %v1423 = vtanh.pop %v1417
        %v1424 = vtanh.pop %v1420
        %v1425 = vpack.c.bf16 %v1424, %v1423
        %s1426 = scalar_lea.vmem [#allocation2], 384
        %v1427 = vld [vmem:[%s1426] sm:$0xf]
        %v1428 = vld [vmem:[%s1426 + $0x4] sm:$0xf]
        %v1429 = vld [vmem:[%s1426 + $0x8] sm:$0xf]
        %v1430 = vld [vmem:[%s1426 + $0xc] sm:$0xf]
        %v1431 = vld [vmem:[%s1426 + $0x10] sm:$0xf]
        %v1432 = vld [vmem:[%s1426 + $0x14] sm:$0xf]
        %v1433 = vld [vmem:[%s1426 + $0x18] sm:$0xf]
        %v1434 = vld [vmem:[%s1426 + $0x1c] sm:$0xf]
        %v1435 = vld [vmem:[%s1426 + $0x20] sm:$0xf]
        %v1436 = vld [vmem:[%s1426 + $0x24] sm:$0xf]
        %v1437 = vld [vmem:[%s1426 + $0x28] sm:$0xf]
        %v1438 = vld [vmem:[%s1426 + $0x2c] sm:$0xf]
        %v1439 = vld [vmem:[%s1426 + $0x30] sm:$0xf]
        %v1440 = vld [vmem:[%s1426 + $0x34] sm:$0xf]
        %v1441 = vld [vmem:[%s1426 + $0x38] sm:$0xf]
        %v1442 = vld [vmem:[%s1426 + $0x3c] sm:$0xf]
        %s1443 = scalar_lea.vmem %s4, 6
        %v1444 = vld [vmem:[%s1443] sm:$0x1]
        %v1446 = vlaneseq
        %v1447 = vshrl.u32 %v1446, 7
        %v1448 = vsub.s32 0, %v1447
        %v1449 = vrot.slane %v1444, %v1448
        %v1467 = vunpack.c.l.b16 %v1427
        %v1468 = vunpack.c.l.b16 %v1428
        %v1469 = vunpack.c.l.b16 %v1429
        %v1470 = vunpack.c.l.b16 %v1430
        %v1471 = vunpack.c.l.b16 %v1431
        %v1472 = vunpack.c.l.b16 %v1432
        %v1473 = vunpack.c.l.b16 %v1433
        %v1474 = vunpack.c.l.b16 %v1434
        %v1475 = vunpack.c.l.b16 %v1435
        %v1476 = vunpack.c.l.b16 %v1436
        %v1477 = vunpack.c.l.b16 %v1437
        %v1478 = vunpack.c.l.b16 %v1438
        %v1479 = vunpack.c.l.b16 %v1439
        %v1480 = vunpack.c.l.b16 %v1440
        %v1481 = vunpack.c.l.b16 %v1441
        %v1482 = vunpack.c.l.b16 %v1442
        %v1483 = vpack.c.b16 %v1468, %v1467
        %v1484 = vpack.c.b16 %v1470, %v1469
        %v1485 = vpack.c.b16 %v1472, %v1471
        %v1486 = vpack.c.b16 %v1474, %v1473
        %v1487 = vpack.c.b16 %v1476, %v1475
        %v1488 = vpack.c.b16 %v1478, %v1477
        %v1489 = vpack.c.b16 %v1480, %v1479
        %v1490 = vpack.c.b16 %v1482, %v1481
        %1499 = vmatprep.subr.bf16.mxu0 0
        %1500 = vmatpush1.bf16.msra.mxu0 %v1490
        %1501 = vmatprep.subr.bf16.mxu0 0
        %1502 = vmatpush1.bf16.msra.mxu0 %v1489
        %1503 = vmatprep.subr.bf16.mxu0 0
        %1504 = vmatpush1.bf16.msra.mxu0 %v1488
        %1505 = vmatprep.subr.bf16.mxu0 0
        %1506 = vmatpush1.bf16.msra.mxu0 %v1487
        %1507 = vmatprep.subr.bf16.mxu0 0
        %1508 = vmatpush1.bf16.msra.mxu0 %v1486
        %1509 = vmatprep.subr.bf16.mxu0 0
        %1510 = vmatpush1.bf16.msra.mxu0 %v1485
        %1511 = vmatprep.subr.bf16.mxu0 0
        %1512 = vmatpush1.bf16.msra.mxu0 %v1484
        %1513 = vmatprep.subr.bf16.mxu0 0
        %1514 = vmatpush1.bf16.msra.mxu0 %v1483
        %1515 = vmatprep.subr.bf16.mxu0 0
        %1516 = vmatpush2.bf16.msra.mxu0 0
        %1517 = vmatprep.subr.bf16.mxu0 0
        %1518 = vmatpush2.bf16.msra.mxu0 0
        %1519 = vmatprep.subr.bf16.mxu0 0
        %1520 = vmatpush2.bf16.msra.mxu0 0
        %1521 = vmatprep.subr.bf16.mxu0 0
        %1522 = vmatpush2.bf16.msra.mxu0 0
        %1523 = vmatprep.subr.bf16.mxu0 0
        %1524 = vmatpush2.bf16.msra.mxu0 0
        %1525 = vmatprep.subr.bf16.mxu0 0
        %1526 = vmatpush2.bf16.msra.mxu0 0
        %1527 = vmatprep.subr.bf16.mxu0 0
        %1528 = vmatpush2.bf16.msra.mxu0 0
        %1529 = vmatprep.subr.bf16.mxu0 0
        %1530 = vmatpush2.bf16.msra.mxu0 0
        %1531 = vmatprep.mubr.bf16.mxu0 0
        %1532 = vmatmul.mubr.bf16.gmra.mxu0 %v1381
        %v1533 = vpop.f32.mrf.mxu0
        %v1534 = vadd.f32 %v1449, %v1533
        %v1535 = vpop.f32.mrf.mxu0
        %v1536 = vpop.f32.mrf.mxu0
        %v1537 = vadd.f32 %v1449, %v1536
        %v1538 = vpop.f32.mrf.mxu0
        %1539 = vdwg.mxu0
        %v1540 = vtanh.pop %v1534
        %v1541 = vtanh.pop %v1537
        %v1542 = vpack.c.bf16 %v1541, %v1540
        %1543 = vmatprep.subr.bf16.mxu0 0
        %1544 = vmatpush1.bf16.msra.mxu0 %v1490
        %1545 = vmatprep.subr.bf16.mxu0 0
        %1546 = vmatpush1.bf16.msra.mxu0 %v1489
        %1547 = vmatprep.subr.bf16.mxu0 0
        %1548 = vmatpush1.bf16.msra.mxu0 %v1488
        %1549 = vmatprep.subr.bf16.mxu0 0
        %1550 = vmatpush1.bf16.msra.mxu0 %v1487
        %1551 = vmatprep.subr.bf16.mxu0 0
        %1552 = vmatpush1.bf16.msra.mxu0 %v1486
        %1553 = vmatprep.subr.bf16.mxu0 0
        %1554 = vmatpush1.bf16.msra.mxu0 %v1485
        %1555 = vmatprep.subr.bf16.mxu0 0
        %1556 = vmatpush1.bf16.msra.mxu0 %v1484
        %1557 = vmatprep.subr.bf16.mxu0 0
        %1558 = vmatpush1.bf16.msra.mxu0 %v1483
        %1559 = vmatprep.subr.bf16.mxu0 0
        %1560 = vmatpush2.bf16.msra.mxu0 0
        %1561 = vmatprep.subr.bf16.mxu0 0
        %1562 = vmatpush2.bf16.msra.mxu0 0
        %1563 = vmatprep.subr.bf16.mxu0 0
        %1564 = vmatpush2.bf16.msra.mxu0 0
        %1565 = vmatprep.subr.bf16.mxu0 0
        %1566 = vmatpush2.bf16.msra.mxu0 0
        %1567 = vmatprep.subr.bf16.mxu0 0
        %1568 = vmatpush2.bf16.msra.mxu0 0
        %1569 = vmatprep.subr.bf16.mxu0 0
        %1570 = vmatpush2.bf16.msra.mxu0 0
        %1571 = vmatprep.subr.bf16.mxu0 0
        %1572 = vmatpush2.bf16.msra.mxu0 0
        %1573 = vmatprep.subr.bf16.mxu0 0
        %1574 = vmatpush2.bf16.msra.mxu0 0
        %1575 = vmatprep.mubr.bf16.mxu0 0
        %1576 = vmatmul.mubr.bf16.gmra.mxu0 %v1425
        %v1577 = vpop.f32.mrf.mxu0
        %v1578 = vadd.f32 %v1449, %v1577
        %v1579 = vpop.f32.mrf.mxu0
        %v1580 = vpop.f32.mrf.mxu0
        %v1581 = vadd.f32 %v1449, %v1580
        %v1582 = vpop.f32.mrf.mxu0
        %1583 = vdwg.mxu0
        %v1584 = vtanh.pop %v1578
        %v1585 = vtanh.pop %v1581
        %v1586 = vpack.c.bf16 %v1585, %v1584
        %s1587 = scalar_lea.vmem [#allocation2], 448
        %v1588 = vld [vmem:[%s1587] sm:$0xf]
        %v1589 = vld [vmem:[%s1587 + $0x4] sm:$0xf]
        %v1590 = vld [vmem:[%s1587 + $0x8] sm:$0xf]
        %v1591 = vld [vmem:[%s1587 + $0xc] sm:$0xf]
        %v1592 = vld [vmem:[%s1587 + $0x10] sm:$0xf]
        %v1593 = vld [vmem:[%s1587 + $0x14] sm:$0xf]
        %v1594 = vld [vmem:[%s1587 + $0x18] sm:$0xf]
        %v1595 = vld [vmem:[%s1587 + $0x1c] sm:$0xf]
        %v1596 = vld [vmem:[%s1587 + $0x20] sm:$0xf]
        %v1597 = vld [vmem:[%s1587 + $0x24] sm:$0xf]
        %v1598 = vld [vmem:[%s1587 + $0x28] sm:$0xf]
        %v1599 = vld [vmem:[%s1587 + $0x2c] sm:$0xf]
        %v1600 = vld [vmem:[%s1587 + $0x30] sm:$0xf]
        %v1601 = vld [vmem:[%s1587 + $0x34] sm:$0xf]
        %v1602 = vld [vmem:[%s1587 + $0x38] sm:$0xf]
        %v1603 = vld [vmem:[%s1587 + $0x3c] sm:$0xf]
        %s1604 = scalar_lea.vmem %s4, 7
        %v1605 = vld [vmem:[%s1604] sm:$0x1]
        %v1607 = vlaneseq
        %v1608 = vshrl.u32 %v1607, 7
        %v1609 = vsub.s32 0, %v1608
        %v1610 = vrot.slane %v1605, %v1609
        %v1628 = vunpack.c.l.b16 %v1588
        %v1629 = vunpack.c.l.b16 %v1589
        %v1630 = vunpack.c.l.b16 %v1590
        %v1631 = vunpack.c.l.b16 %v1591
        %v1632 = vunpack.c.l.b16 %v1592
        %v1633 = vunpack.c.l.b16 %v1593
        %v1634 = vunpack.c.l.b16 %v1594
        %v1635 = vunpack.c.l.b16 %v1595
        %v1636 = vunpack.c.l.b16 %v1596
        %v1637 = vunpack.c.l.b16 %v1597
        %v1638 = vunpack.c.l.b16 %v1598
        %v1639 = vunpack.c.l.b16 %v1599
        %v1640 = vunpack.c.l.b16 %v1600
        %v1641 = vunpack.c.l.b16 %v1601
        %v1642 = vunpack.c.l.b16 %v1602
        %v1643 = vunpack.c.l.b16 %v1603
        %v1644 = vpack.c.b16 %v1629, %v1628
        %v1645 = vpack.c.b16 %v1631, %v1630
        %v1646 = vpack.c.b16 %v1633, %v1632
        %v1647 = vpack.c.b16 %v1635, %v1634
        %v1648 = vpack.c.b16 %v1637, %v1636
        %v1649 = vpack.c.b16 %v1639, %v1638
        %v1650 = vpack.c.b16 %v1641, %v1640
        %v1651 = vpack.c.b16 %v1643, %v1642
        %1660 = vmatprep.subr.bf16.mxu0 0
        %1661 = vmatpush1.bf16.msra.mxu0 %v1651
        %1662 = vmatprep.subr.bf16.mxu0 0
        %1663 = vmatpush1.bf16.msra.mxu0 %v1650
        %1664 = vmatprep.subr.bf16.mxu0 0
        %1665 = vmatpush1.bf16.msra.mxu0 %v1649
        %1666 = vmatprep.subr.bf16.mxu0 0
        %1667 = vmatpush1.bf16.msra.mxu0 %v1648
        %1668 = vmatprep.subr.bf16.mxu0 0
        %1669 = vmatpush1.bf16.msra.mxu0 %v1647
        %1670 = vmatprep.subr.bf16.mxu0 0
        %1671 = vmatpush1.bf16.msra.mxu0 %v1646
        %1672 = vmatprep.subr.bf16.mxu0 0
        %1673 = vmatpush1.bf16.msra.mxu0 %v1645
        %1674 = vmatprep.subr.bf16.mxu0 0
        %1675 = vmatpush1.bf16.msra.mxu0 %v1644
        %1676 = vmatprep.subr.bf16.mxu0 0
        %1677 = vmatpush2.bf16.msra.mxu0 0
        %1678 = vmatprep.subr.bf16.mxu0 0
        %1679 = vmatpush2.bf16.msra.mxu0 0
        %1680 = vmatprep.subr.bf16.mxu0 0
        %1681 = vmatpush2.bf16.msra.mxu0 0
        %1682 = vmatprep.subr.bf16.mxu0 0
        %1683 = vmatpush2.bf16.msra.mxu0 0
        %1684 = vmatprep.subr.bf16.mxu0 0
        %1685 = vmatpush2.bf16.msra.mxu0 0
        %1686 = vmatprep.subr.bf16.mxu0 0
        %1687 = vmatpush2.bf16.msra.mxu0 0
        %1688 = vmatprep.subr.bf16.mxu0 0
        %1689 = vmatpush2.bf16.msra.mxu0 0
        %1690 = vmatprep.subr.bf16.mxu0 0
        %1691 = vmatpush2.bf16.msra.mxu0 0
        %1692 = vmatprep.mubr.bf16.mxu0 0
        %1693 = vmatmul.mubr.bf16.gmra.mxu0 %v1542
        %v1694 = vpop.f32.mrf.mxu0
        %v1695 = vadd.f32 %v1610, %v1694
        %v1696 = vpop.f32.mrf.mxu0
        %v1697 = vpop.f32.mrf.mxu0
        %v1698 = vadd.f32 %v1610, %v1697
        %v1699 = vpop.f32.mrf.mxu0
        %1700 = vdwg.mxu0
        %v1701 = vtanh.pop %v1695
        %v1702 = vtanh.pop %v1698
        %v1703 = vpack.c.bf16 %v1702, %v1701
        %1704 = vmatprep.subr.bf16.mxu0 0
        %1705 = vmatpush1.bf16.msra.mxu0 %v1651
        %1706 = vmatprep.subr.bf16.mxu0 0
        %1707 = vmatpush1.bf16.msra.mxu0 %v1650
        %1708 = vmatprep.subr.bf16.mxu0 0
        %1709 = vmatpush1.bf16.msra.mxu0 %v1649
        %1710 = vmatprep.subr.bf16.mxu0 0
        %1711 = vmatpush1.bf16.msra.mxu0 %v1648
        %1712 = vmatprep.subr.bf16.mxu0 0
        %1713 = vmatpush1.bf16.msra.mxu0 %v1647
        %1714 = vmatprep.subr.bf16.mxu0 0
        %1715 = vmatpush1.bf16.msra.mxu0 %v1646
        %1716 = vmatprep.subr.bf16.mxu0 0
        %1717 = vmatpush1.bf16.msra.mxu0 %v1645
        %1718 = vmatprep.subr.bf16.mxu0 0
        %1719 = vmatpush1.bf16.msra.mxu0 %v1644
        %1720 = vmatprep.subr.bf16.mxu0 0
        %1721 = vmatpush2.bf16.msra.mxu0 0
        %1722 = vmatprep.subr.bf16.mxu0 0
        %1723 = vmatpush2.bf16.msra.mxu0 0
        %1724 = vmatprep.subr.bf16.mxu0 0
        %1725 = vmatpush2.bf16.msra.mxu0 0
        %1726 = vmatprep.subr.bf16.mxu0 0
        %1727 = vmatpush2.bf16.msra.mxu0 0
        %1728 = vmatprep.subr.bf16.mxu0 0
        %1729 = vmatpush2.bf16.msra.mxu0 0
        %1730 = vmatprep.subr.bf16.mxu0 0
        %1731 = vmatpush2.bf16.msra.mxu0 0
        %1732 = vmatprep.subr.bf16.mxu0 0
        %1733 = vmatpush2.bf16.msra.mxu0 0
        %1734 = vmatprep.subr.bf16.mxu0 0
        %1735 = vmatpush2.bf16.msra.mxu0 0
        %1736 = vmatprep.mubr.bf16.mxu0 0
        %1737 = vmatmul.mubr.bf16.gmra.mxu0 %v1586
        %v1738 = vpop.f32.mrf.mxu0
        %v1739 = vadd.f32 %v1610, %v1738
        %v1740 = vpop.f32.mrf.mxu0
        %v1741 = vpop.f32.mrf.mxu0
        %v1742 = vadd.f32 %v1610, %v1741
        %v1743 = vpop.f32.mrf.mxu0
        %1744 = vdwg.mxu0
        %v1745 = vtanh.pop %v1739
        %v1746 = vtanh.pop %v1742
        %v1747 = vpack.c.bf16 %v1746, %v1745
        %s1748 = scalar_lea.vmem [#allocation2], 512
        %v1749 = vld [vmem:[%s1748] sm:$0xf]
        %v1750 = vld [vmem:[%s1748 + $0x4] sm:$0xf]
        %v1751 = vld [vmem:[%s1748 + $0x8] sm:$0xf]
        %v1752 = vld [vmem:[%s1748 + $0xc] sm:$0xf]
        %v1753 = vld [vmem:[%s1748 + $0x10] sm:$0xf]
        %v1754 = vld [vmem:[%s1748 + $0x14] sm:$0xf]
        %v1755 = vld [vmem:[%s1748 + $0x18] sm:$0xf]
        %v1756 = vld [vmem:[%s1748 + $0x1c] sm:$0xf]
        %v1757 = vld [vmem:[%s1748 + $0x20] sm:$0xf]
        %v1758 = vld [vmem:[%s1748 + $0x24] sm:$0xf]
        %v1759 = vld [vmem:[%s1748 + $0x28] sm:$0xf]
        %v1760 = vld [vmem:[%s1748 + $0x2c] sm:$0xf]
        %v1761 = vld [vmem:[%s1748 + $0x30] sm:$0xf]
        %v1762 = vld [vmem:[%s1748 + $0x34] sm:$0xf]
        %v1763 = vld [vmem:[%s1748 + $0x38] sm:$0xf]
        %v1764 = vld [vmem:[%s1748 + $0x3c] sm:$0xf]
        %s1765 = scalar_lea.vmem %s4, 8
        %v1766 = vld [vmem:[%s1765] sm:$0x1]
        %v1768 = vlaneseq
        %v1769 = vshrl.u32 %v1768, 7
        %v1770 = vsub.s32 0, %v1769
        %v1771 = vrot.slane %v1766, %v1770
        %v1789 = vunpack.c.l.b16 %v1749
        %v1790 = vunpack.c.l.b16 %v1750
        %v1791 = vunpack.c.l.b16 %v1751
        %v1792 = vunpack.c.l.b16 %v1752
        %v1793 = vunpack.c.l.b16 %v1753
        %v1794 = vunpack.c.l.b16 %v1754
        %v1795 = vunpack.c.l.b16 %v1755
        %v1796 = vunpack.c.l.b16 %v1756
        %v1797 = vunpack.c.l.b16 %v1757
        %v1798 = vunpack.c.l.b16 %v1758
        %v1799 = vunpack.c.l.b16 %v1759
        %v1800 = vunpack.c.l.b16 %v1760
        %v1801 = vunpack.c.l.b16 %v1761
        %v1802 = vunpack.c.l.b16 %v1762
        %v1803 = vunpack.c.l.b16 %v1763
        %v1804 = vunpack.c.l.b16 %v1764
        %v1805 = vpack.c.b16 %v1790, %v1789
        %v1806 = vpack.c.b16 %v1792, %v1791
        %v1807 = vpack.c.b16 %v1794, %v1793
        %v1808 = vpack.c.b16 %v1796, %v1795
        %v1809 = vpack.c.b16 %v1798, %v1797
        %v1810 = vpack.c.b16 %v1800, %v1799
        %v1811 = vpack.c.b16 %v1802, %v1801
        %v1812 = vpack.c.b16 %v1804, %v1803
        %1821 = vmatprep.subr.bf16.mxu0 0
        %1822 = vmatpush1.bf16.msra.mxu0 %v1812
        %1823 = vmatprep.subr.bf16.mxu0 0
        %1824 = vmatpush1.bf16.msra.mxu0 %v1811
        %1825 = vmatprep.subr.bf16.mxu0 0
        %1826 = vmatpush1.bf16.msra.mxu0 %v1810
        %1827 = vmatprep.subr.bf16.mxu0 0
        %1828 = vmatpush1.bf16.msra.mxu0 %v1809
        %1829 = vmatprep.subr.bf16.mxu0 0
        %1830 = vmatpush1.bf16.msra.mxu0 %v1808
        %1831 = vmatprep.subr.bf16.mxu0 0
        %1832 = vmatpush1.bf16.msra.mxu0 %v1807
        %1833 = vmatprep.subr.bf16.mxu0 0
        %1834 = vmatpush1.bf16.msra.mxu0 %v1806
        %1835 = vmatprep.subr.bf16.mxu0 0
        %1836 = vmatpush1.bf16.msra.mxu0 %v1805
        %1837 = vmatprep.subr.bf16.mxu0 0
        %1838 = vmatpush2.bf16.msra.mxu0 0
        %1839 = vmatprep.subr.bf16.mxu0 0
        %1840 = vmatpush2.bf16.msra.mxu0 0
        %1841 = vmatprep.subr.bf16.mxu0 0
        %1842 = vmatpush2.bf16.msra.mxu0 0
        %1843 = vmatprep.subr.bf16.mxu0 0
        %1844 = vmatpush2.bf16.msra.mxu0 0
        %1845 = vmatprep.subr.bf16.mxu0 0
        %1846 = vmatpush2.bf16.msra.mxu0 0
        %1847 = vmatprep.subr.bf16.mxu0 0
        %1848 = vmatpush2.bf16.msra.mxu0 0
        %1849 = vmatprep.subr.bf16.mxu0 0
        %1850 = vmatpush2.bf16.msra.mxu0 0
        %1851 = vmatprep.subr.bf16.mxu0 0
        %1852 = vmatpush2.bf16.msra.mxu0 0
        %1853 = vmatprep.mubr.bf16.mxu0 0
        %1854 = vmatmul.mubr.bf16.gmra.mxu0 %v1703
        %v1855 = vpop.f32.mrf.mxu0
        %v1856 = vadd.f32 %v1771, %v1855
        %v1857 = vpop.f32.mrf.mxu0
        %v1858 = vpop.f32.mrf.mxu0
        %v1859 = vadd.f32 %v1771, %v1858
        %v1860 = vpop.f32.mrf.mxu0
        %1861 = vdwg.mxu0
        %v1862 = vtanh.pop %v1856
        %v1863 = vtanh.pop %v1859
        %v1864 = vpack.c.bf16 %v1863, %v1862
        %1865 = vmatprep.subr.bf16.mxu0 0
        %1866 = vmatpush1.bf16.msra.mxu0 %v1812
        %1867 = vmatprep.subr.bf16.mxu0 0
        %1868 = vmatpush1.bf16.msra.mxu0 %v1811
        %1869 = vmatprep.subr.bf16.mxu0 0
        %1870 = vmatpush1.bf16.msra.mxu0 %v1810
        %1871 = vmatprep.subr.bf16.mxu0 0
        %1872 = vmatpush1.bf16.msra.mxu0 %v1809
        %1873 = vmatprep.subr.bf16.mxu0 0
        %1874 = vmatpush1.bf16.msra.mxu0 %v1808
        %1875 = vmatprep.subr.bf16.mxu0 0
        %1876 = vmatpush1.bf16.msra.mxu0 %v1807
        %1877 = vmatprep.subr.bf16.mxu0 0
        %1878 = vmatpush1.bf16.msra.mxu0 %v1806
        %1879 = vmatprep.subr.bf16.mxu0 0
        %1880 = vmatpush1.bf16.msra.mxu0 %v1805
        %1881 = vmatprep.subr.bf16.mxu0 0
        %1882 = vmatpush2.bf16.msra.mxu0 0
        %1883 = vmatprep.subr.bf16.mxu0 0
        %1884 = vmatpush2.bf16.msra.mxu0 0
        %1885 = vmatprep.subr.bf16.mxu0 0
        %1886 = vmatpush2.bf16.msra.mxu0 0
        %1887 = vmatprep.subr.bf16.mxu0 0
        %1888 = vmatpush2.bf16.msra.mxu0 0
        %1889 = vmatprep.subr.bf16.mxu0 0
        %1890 = vmatpush2.bf16.msra.mxu0 0
        %1891 = vmatprep.subr.bf16.mxu0 0
        %1892 = vmatpush2.bf16.msra.mxu0 0
        %1893 = vmatprep.subr.bf16.mxu0 0
        %1894 = vmatpush2.bf16.msra.mxu0 0
        %1895 = vmatprep.subr.bf16.mxu0 0
        %1896 = vmatpush2.bf16.msra.mxu0 0
        %1897 = vmatprep.mubr.bf16.mxu0 0
        %1898 = vmatmul.mubr.bf16.gmra.mxu0 %v1747
        %v1899 = vpop.f32.mrf.mxu0
        %v1900 = vadd.f32 %v1771, %v1899
        %v1901 = vpop.f32.mrf.mxu0
        %v1902 = vpop.f32.mrf.mxu0
        %v1903 = vadd.f32 %v1771, %v1902
        %v1904 = vpop.f32.mrf.mxu0
        %1905 = vdwg.mxu0
        %v1906 = vtanh.pop %v1900
        %v1907 = vtanh.pop %v1903
        %v1908 = vpack.c.bf16 %v1907, %v1906
        %v1910 = vlaneseq
        %v1911 = vshrl.u32 %v1910, 7
        %v1912 = vsub.s32 0, %v1911
        %v1913 = vrot.slane %v334, %v1912
        %v1931 = vunpack.c.l.b16 %v318
        %v1932 = vunpack.c.l.b16 %v319
        %v1933 = vunpack.c.l.b16 %v320
        %v1934 = vunpack.c.l.b16 %v321
        %v1935 = vunpack.c.l.b16 %v322
        %v1936 = vunpack.c.l.b16 %v323
        %v1937 = vunpack.c.l.b16 %v324
        %v1938 = vunpack.c.l.b16 %v325
        %v1939 = vunpack.c.l.b16 %v326
        %v1940 = vunpack.c.l.b16 %v327
        %v1941 = vunpack.c.l.b16 %v328
        %v1942 = vunpack.c.l.b16 %v329
        %v1943 = vunpack.c.l.b16 %v330
        %v1944 = vunpack.c.l.b16 %v331
        %v1945 = vunpack.c.l.b16 %v332
        %v1946 = vunpack.c.l.b16 %v333
        %v1947 = vpack.c.b16 %v1932, %v1931
        %v1948 = vpack.c.b16 %v1934, %v1933
        %v1949 = vpack.c.b16 %v1936, %v1935
        %v1950 = vpack.c.b16 %v1938, %v1937
        %v1951 = vpack.c.b16 %v1940, %v1939
        %v1952 = vpack.c.b16 %v1942, %v1941
        %v1953 = vpack.c.b16 %v1944, %v1943
        %v1954 = vpack.c.b16 %v1946, %v1945
        %1963 = vmatprep.subr.bf16.mxu0 0
        %1964 = vmatpush1.bf16.msra.mxu0 %v1954
        %1965 = vmatprep.subr.bf16.mxu0 0
        %1966 = vmatpush1.bf16.msra.mxu0 %v1953
        %1967 = vmatprep.subr.bf16.mxu0 0
        %1968 = vmatpush1.bf16.msra.mxu0 %v1952
        %1969 = vmatprep.subr.bf16.mxu0 0
        %1970 = vmatpush1.bf16.msra.mxu0 %v1951
        %1971 = vmatprep.subr.bf16.mxu0 0
        %1972 = vmatpush1.bf16.msra.mxu0 %v1950
        %1973 = vmatprep.subr.bf16.mxu0 0
        %1974 = vmatpush1.bf16.msra.mxu0 %v1949
        %1975 = vmatprep.subr.bf16.mxu0 0
        %1976 = vmatpush1.bf16.msra.mxu0 %v1948
        %1977 = vmatprep.subr.bf16.mxu0 0
        %1978 = vmatpush1.bf16.msra.mxu0 %v1947
        %1979 = vmatprep.subr.bf16.mxu0 0
        %1980 = vmatpush2.bf16.msra.mxu0 0
        %1981 = vmatprep.subr.bf16.mxu0 0
        %1982 = vmatpush2.bf16.msra.mxu0 0
        %1983 = vmatprep.subr.bf16.mxu0 0
        %1984 = vmatpush2.bf16.msra.mxu0 0
        %1985 = vmatprep.subr.bf16.mxu0 0
        %1986 = vmatpush2.bf16.msra.mxu0 0
        %1987 = vmatprep.subr.bf16.mxu0 0
        %1988 = vmatpush2.bf16.msra.mxu0 0
        %1989 = vmatprep.subr.bf16.mxu0 0
        %1990 = vmatpush2.bf16.msra.mxu0 0
        %1991 = vmatprep.subr.bf16.mxu0 0
        %1992 = vmatpush2.bf16.msra.mxu0 0
        %1993 = vmatprep.subr.bf16.mxu0 0
        %1994 = vmatpush2.bf16.msra.mxu0 0
        %1995 = vmatprep.mubr.bf16.mxu0 0
        %1996 = vmatmul.mubr.bf16.gmra.mxu0 %v1864
        %v1997 = vpop.f32.mrf.mxu0
        %v1998 = vadd.f32 %v1913, %v1997
        %v1999 = vpop.f32.mrf.mxu0
        %v2000 = vpop.f32.mrf.mxu0
        %v2001 = vadd.f32 %v1913, %v2000
        %v2002 = vpop.f32.mrf.mxu0
        %2003 = vdwg.mxu0
        %v2004 = vpack.c.bf16 %v2001, %v1998
        %v2006 = vunpack.c.l.b16 %v2004
        %v2007 = vunpack.c.h.b16 %v2004
        %v2008 = vpack.c.b16 %v2006, %v2006
        %v2009 = vpack.c.b16 %v2007, %v2007
        %2012 = vst [vmem:[%s310] sm:$0xf] %v2008
        %2013 = vst [vmem:[%s310 + $0x4] sm:$0xf] %v2009
        %2014 = vmatprep.subr.bf16.mxu0 0
        %2015 = vmatpush1.bf16.msra.mxu0 %v1954
        %2016 = vmatprep.subr.bf16.mxu0 0
        %2017 = vmatpush1.bf16.msra.mxu0 %v1953
        %2018 = vmatprep.subr.bf16.mxu0 0
        %2019 = vmatpush1.bf16.msra.mxu0 %v1952
        %2020 = vmatprep.subr.bf16.mxu0 0
        %2021 = vmatpush1.bf16.msra.mxu0 %v1951
        %2022 = vmatprep.subr.bf16.mxu0 0
        %2023 = vmatpush1.bf16.msra.mxu0 %v1950
        %2024 = vmatprep.subr.bf16.mxu0 0
        %2025 = vmatpush1.bf16.msra.mxu0 %v1949
        %2026 = vmatprep.subr.bf16.mxu0 0
        %2027 = vmatpush1.bf16.msra.mxu0 %v1948
        %2028 = vmatprep.subr.bf16.mxu0 0
        %2029 = vmatpush1.bf16.msra.mxu0 %v1947
        %2030 = vmatprep.subr.bf16.mxu0 0
        %2031 = vmatpush2.bf16.msra.mxu0 0
        %2032 = vmatprep.subr.bf16.mxu0 0
        %2033 = vmatpush2.bf16.msra.mxu0 0
        %2034 = vmatprep.subr.bf16.mxu0 0
        %2035 = vmatpush2.bf16.msra.mxu0 0
        %2036 = vmatprep.subr.bf16.mxu0 0
        %2037 = vmatpush2.bf16.msra.mxu0 0
        %2038 = vmatprep.subr.bf16.mxu0 0
        %2039 = vmatpush2.bf16.msra.mxu0 0
        %2040 = vmatprep.subr.bf16.mxu0 0
        %2041 = vmatpush2.bf16.msra.mxu0 0
        %2042 = vmatprep.subr.bf16.mxu0 0
        %2043 = vmatpush2.bf16.msra.mxu0 0
        %2044 = vmatprep.subr.bf16.mxu0 0
        %2045 = vmatpush2.bf16.msra.mxu0 0
        %2046 = vmatprep.mubr.bf16.mxu0 0
        %2047 = vmatmul.mubr.bf16.gmra.mxu0 %v1908
        %v2048 = vpop.f32.mrf.mxu0
        %v2049 = vadd.f32 %v1913, %v2048
        %v2050 = vpop.f32.mrf.mxu0
        %v2051 = vpop.f32.mrf.mxu0
        %v2052 = vadd.f32 %v1913, %v2051
        %v2053 = vpop.f32.mrf.mxu0
        %2054 = vdwg.mxu0
        %v2055 = vpack.c.bf16 %v2052, %v2049
        %v2057 = vunpack.c.l.b16 %v2055
        %v2058 = vunpack.c.h.b16 %v2055
        %v2059 = vpack.c.b16 %v2057, %v2057
        %v2060 = vpack.c.b16 %v2058, %v2058
        %2063 = vst [vmem:[%s310 + $0x8] sm:$0xf] %v2059
        %2064 = vst [vmem:[%s310 + $0xc] sm:$0xf] %v2060
        %s2065 = smul.u32 4, %s20
        %p2066 = scmp.lt.s32.totalorder %s2065, 7
        %s2067 = scalar_select %p2066, %s2065, 7
        %s2068 = smul.addr %s2067, 4
        %s2069 = scalar_lea.vmem %s7, %s2068
        // Predicated region
        $region57: #{deep_binary_net.1} parent=47 // pred_check
          %p2070 = pneg %p190
        $region58: #{deep_binary_net.1} parent=47 // pred_check_branch
          %2072 = sbr.rel (%p2070) target = $region60
        $region59: #{deep_binary_net.1} parent=47 // pred_region
          %s2073 = smul.u32 4, %s20
        $region60: #{deep_binary_net.1} parent=47 // pred_fallthru
          _
      $region48: #{deep_binary_net.1} parent=5 // pred_fallthru
        _
      %p2074 = scmp.le.s32.totalorder 2, %s15
      // Predicated region
      $region61: #{deep_binary_net.1} parent=5 // pred_check
        %p2075 = pneg %p2074
      $region62: #{deep_binary_net.1} parent=5 // pred_check_branch
        %2077 = sbr.rel (%p2075) target = $region64
      $region63: #{deep_binary_net.1} parent=5 // pred_region
        %s2078 = ssub.s32 %s15, 2
        // Predicated region
        $region65: #{deep_binary_net.1} parent=63 // pred_check
          %p2079 = pneg %p196
        $region66: #{deep_binary_net.1} parent=63 // pred_check_branch
          %2081 = sbr.rel (%p2079) target = $region68
        $region67: #{deep_binary_net.1} parent=63 // pred_region
          %s2082 = smul.u32 4, %s21
          %p2083 = scmp.lt.s32.totalorder %s2082, 7
          %s2084 = scalar_select %p2083, %s2082, 7
          %s2085 = smul.addr %s2084, 4
          %s2086 = scalar_lea.vmem %s7, %s2085
        $region68: #{deep_binary_net.1} parent=63 // pred_fallthru
          _
      $region64: #{deep_binary_net.1} parent=5 // pred_fallthru
        _
    $region6: #{deep_binary_net.1} parent=1 // loop_footer
      %s19 = sadd.s32 1, %s15
    $region7: #{deep_binary_net.1} parent=1 // loop_footer_branch
      %14 = sbr.rel target = $region3
    $region8: #{deep_binary_net.1} parent=1 // loop_exit
      _
    %2087 = vsyncpa [#allocation3], 1
    %s2088 = scalar_lea.sflag [#allocation3], 1
    %2089 = vsyncpa %s2088, 1
    %2090 = vsyncpa [#allocation5], 1

</llo_original>
